<compile_context>
chip_gen: v7x
topology: tpu7x:2x2x1
jax: 0.10.0
libtpu: 0.0.40
codegen_flags: <defaults>
</compile_context>

<pallas_src>
import math

import jax
import jax.numpy as jnp
from jax.experimental import pallas as pl
from jax.experimental.pallas import tpu as pltpu

BN_EPS = 1e-5
_VMEM_LIMIT_BYTES = 48 * 1024 * 1024


# ---------------------------------------------------------------------------
# Kernels
# ---------------------------------------------------------------------------
def _conv_stats_kernel(x_ref, w_ref, m_ref, conv_ref, sum_ref, ssq_ref):
    """One lane-tile of the 3x3 conv (3 matmuls over in-kernel dx taps) + stats.

    x_ref   : (K3, T)       bf16  three dy-shifted input copies (K3 = 3*Cin rows,
                                  flattened B*H*W pixels on lanes).
    w_ref   : (3, Cout, K3) bf16  per-kx weight matrices (left / centre / right).
    m_ref   : (2, T)        f32   column masks: row 0 zeroes x==0, row 1 x==W-1.
    conv_ref: (Cout, T)     f32   conv output tile (lane-dense).
    sum_ref : (1, Cout, 1)  f32   this tile's per-channel sum            (partial).
    ssq_ref : (1, Cout, 1)  f32   this tile's per-channel sum of squares (partial).
    """
    x = x_ref[...]
    t = x.shape[1]
    # dx taps via lane rotation (XLU) + edge masks.  Tiles are a multiple of W,
    # so the wrap lanes coincide with the masked image-row-boundary columns.
    x32 = x.astype(jnp.float32)                          # exact up-cast
    left = pltpu.roll(x32, 1, 1) * m_ref[0:1, :]         # tap x-1 (col 0 masked)
    right = pltpu.roll(x32, t - 1, 1) * m_ref[1:2, :]    # tap x+1 (col W-1 masked)

    acc = jnp.dot(w_ref[1], x, preferred_element_type=jnp.float32)
    acc += jnp.dot(w_ref[0], left.astype(jnp.bfloat16),
                   preferred_element_type=jnp.float32)
    acc += jnp.dot(w_ref[2], right.astype(jnp.bfloat16),
                   preferred_element_type=jnp.float32)
    conv_ref[...] = acc

    # Per-tile partial statistics (lane-axis reduce); padded lanes are exactly
    # zero and contribute nothing.  Partials keep the grid fully "parallel".
    # TODO(synk): E[x^2]-E[x]^2 is cancellation-prone for large-mean channels;
    # a Welford-style merge of these per-tile partials would be safer.
    sum_ref[0] = jnp.sum(acc, axis=1, keepdims=True)
    ssq_ref[0] = jnp.sum(acc * acc, axis=1, keepdims=True)


def _bn_relu_kernel(conv_ref, s_ref, t_ref, o_ref):
    """y = ReLU(s * conv + t)   (stage 1: no residual, no zeros-slab DMA)."""
    o_ref[...] = jnp.maximum(conv_ref[...] * s_ref[...] + t_ref[...], 0.0)


def _bn_res_relu_kernel(conv_ref, s_ref, t_ref, res_ref, o_ref):
    """y = ReLU(s * conv + t + residual)   (stage 2)."""
    o_ref[...] = jnp.maximum(
        conv_ref[...] * s_ref[...] + t_ref[...] + res_ref[...], 0.0)


# ---------------------------------------------------------------------------
# pallas_call wrappers
# ---------------------------------------------------------------------------
def _conv_stats_call(xdy, w3, mask, tile_n):
    k3_pad, n_pad = xdy.shape
    c_out = w3.shape[1]
    num_tiles = n_pad // tile_n
    stat_shape = jax.ShapeDtypeStruct((num_tiles, c_out, 1), jnp.float32)
    stat_spec = pl.BlockSpec((1, c_out, 1), lambda j: (j, 0, 0))
    return pl.pallas_call(
        _conv_stats_kernel,
        out_shape=(jax.ShapeDtypeStruct((c_out, n_pad), jnp.float32),
                   stat_shape, stat_shape),
        grid=(num_tiles,),
        in_specs=[
            pl.BlockSpec((k3_pad, tile_n), lambda j: (0, j)),
            pl.BlockSpec((3, c_out, k3_pad), lambda j: (0, 0, 0)),   # resident
            pl.BlockSpec((2, tile_n), lambda j: (0, 0)),             # resident
        ],
        out_specs=(pl.BlockSpec((c_out, tile_n), lambda j: (0, j)),
                   stat_spec, stat_spec),
        compiler_params=pltpu.CompilerParams(
            dimension_semantics=("parallel",),      # no cross-tile state
            vmem_limit_bytes=_VMEM_LIMIT_BYTES),
    )(xdy, w3, mask)


def _bn_apply_call(conv_out, s, t, residual, tile_n):
    c_out, n_pad = conv_out.shape
    tile_spec = pl.BlockSpec((c_out, tile_n), lambda j: (0, j))
    vec_spec = pl.BlockSpec((c_out, 1), lambda j: (0, 0))
    if residual is None:
        kernel, args = _bn_relu_kernel, (conv_out, s, t)
        in_specs = [tile_spec, vec_spec, vec_spec]
    else:
        kernel, args = _bn_res_relu_kernel, (conv_out, s, t, residual)
        in_specs = [tile_spec, vec_spec, vec_spec, tile_spec]
    return pl.pallas_call(
        kernel,
        out_shape=jax.ShapeDtypeStruct((c_out, n_pad), jnp.float32),
        grid=(n_pad // tile_n,),
        in_specs=in_specs,
        out_specs=tile_spec,
        compiler_params=pltpu.CompilerParams(
            dimension_semantics=("parallel",),
            vmem_limit_bytes=_VMEM_LIMIT_BYTES),
    )(*args)


# ---------------------------------------------------------------------------
# Host-side plumbing (layout, dy slabs, BN folding)
# ---------------------------------------------------------------------------
def _dy_slabs(x_cbhw):
    """(C,B,H,W) -> (3*C, B*H*W): row dy*C + c holds x shifted vertically by dy-1."""
    c, b, h, w = x_cbhw.shape
    xp = jnp.pad(x_cbhw, ((0, 0), (0, 0), (1, 1), (0, 0)))
    slabs = [xp[:, :, dy:dy + h, :] for dy in range(3)]
    return jnp.stack(slabs, axis=0).reshape(3 * c, b * h * w)


def _weight_per_kx(w_oihw):
    """(Cout,Cin,3,3) -> (3, Cout, 3*Cin) with [kx][o, ky*Cin + cin] = w[o,cin,ky,kx]."""
    c_out, c_in, kh, kw = w_oihw.shape
    return jnp.transpose(w_oihw, (3, 0, 2, 1)).reshape(kw, c_out, kh * c_in)


def _edge_masks(tile_n, width):
    """(2, tile_n) f32: row 0 zeroes image columns x==0, row 1 zeroes x==W-1."""
    col = jnp.arange(tile_n, dtype=jnp.int32) % width
    return jnp.stack([(col != 0), (col != width - 1)]).astype(jnp.float32)


def _fold_bn(part_sum, part_ssq, gamma, beta, n):
    """Fold training-mode BN into per-channel scale s and shift t (f32)."""
    csum = jnp.sum(part_sum, axis=0)               # (Cout, 1)
    cssq = jnp.sum(part_ssq, axis=0)
    mean = csum / n
    var = jnp.maximum(cssq / n - mean * mean, 0.0)
    s = gamma.reshape(-1, 1) * jax.lax.rsqrt(var + BN_EPS)
    t = beta.reshape(-1, 1) - s * mean
    return s, t


def _choose_tile_n(n_real, k3_pad, width):
    """Lane tile: a multiple of lcm(W,128) (so the in-kernel dx-roll masks are
    exact at image-row boundaries), up to 16K lanes / ~8 MiB of bf16 input slab.
    TODO(synk): widths with lcm(W,128) >> 16K lanes need the halo-DMA variant."""
    unit = (width * 128) // math.gcd(width, 128)
    budget_lanes = (8 * 1024 * 1024) // (2 * k3_pad)
    lanes = min(16384, budget_lanes)
    tile = max(unit, (lanes // unit) * unit)
    n_ceil = -(-n_real // unit) * unit
    return min(tile, n_ceil)


def _stage(x_cbhw, w_oihw, gamma, beta, residual_flat=None):
    """conv3x3 -> BN(batch stats) -> (+residual) -> ReLU, channels-major output."""
    c_in, b, h, w = x_cbhw.shape
    n = b * h * w

    xdy = _dy_slabs(x_cbhw)                        # (3*Cin, N) f32
    w3 = _weight_per_kx(w_oihw)                    # (3, Cout, 3*Cin) f32

    k3 = 3 * c_in
    k3_pad = -(-k3 // 16) * 16                     # bf16 sublane packing
    tile_n = _choose_tile_n(n, k3_pad, w)
    n_pad = -(-n // tile_n) * tile_n

    xdy = jnp.pad(xdy, ((0, k3_pad - k3), (0, n_pad - n))).astype(jnp.bfloat16)
    w3 = jnp.pad(w3, ((0, 0), (0, 0), (0, k3_pad - k3))).astype(jnp.bfloat16)
    mask = _edge_masks(tile_n, w)

    conv_out, psum, pssq = _conv_stats_call(xdy, w3, mask, tile_n)
    s, t = _fold_bn(psum, pssq, gamma, beta, n)    # padded columns contribute 0

    if residual_flat is not None:
        residual_flat = jnp.pad(residual_flat, ((0, 0), (0, n_pad - n)))
    y = _bn_apply_call(conv_out, s, t, residual_flat, tile_n)
    return y[:, :n]                                # (Cout, N) f32


def init_params(key, in_channels, out_channels):
    """He-normal conv weights, zero conv biases, default BN params.
    (Biases are kept for interface parity; training-mode BN cancels them.)"""
    k1, k2 = jax.random.split(key)
    fan_in1 = in_channels * 9
    fan_in2 = out_channels * 9
    w1 = jax.random.normal(k1, (out_channels, in_channels, 3, 3), jnp.float32) * math.sqrt(2.0 / fan_in1)
    w2 = jax.random.normal(k2, (out_channels, out_channels, 3, 3), jnp.float32) * math.sqrt(2.0 / fan_in2)
    return dict(
        w1=w1, b1=jnp.zeros((out_channels,), jnp.float32),
        w2=w2, b2=jnp.zeros((out_channels,), jnp.float32),
        g1=jnp.ones((out_channels,), jnp.float32), bt1=jnp.zeros((out_channels,), jnp.float32),
        g2=jnp.ones((out_channels,), jnp.float32), bt2=jnp.zeros((out_channels,), jnp.float32),
    )


def inital_conv_block(params, x_nchw):
    """Forward pass. x_nchw: (B, Cin, H, W) -> (B, Cout, H, W)."""
    b, _, h, w = x_nchw.shape
    c_out = params["w1"].shape[0]
    x_cbhw = jnp.transpose(x_nchw, (1, 0, 2, 3)).astype(jnp.float32)

    # Stage 1: conv1 -> BN1 -> ReLU                (no residual)
    y1 = _stage(x_cbhw, params["w1"], params["g1"], params["bt1"])            # (Cout, N)

    # Stage 2: conv2 -> BN2 -> (+y1) -> ReLU       (Dropout2d/Dropout = identity)
    y1_cbhw = y1.reshape(c_out, b, h, w)
    y2 = _stage(y1_cbhw, params["w2"], params["g2"], params["bt2"], residual_flat=y1)

    return jnp.transpose(y2.reshape(c_out, b, h, w), (1, 0, 2, 3))            # NCHW


# ---------------------------------------------------------------------------
# Reference + self-test
# ---------------------------------------------------------------------------
def _reference(params, x_nchw):
    """Plain-JAX reference.  Conv inputs are rounded to bf16 to mirror the
    kernel's MXU input precision; accumulation and all BN math stay in f32."""
    def conv(x, wgt, bvec):
        xq = x.astype(jnp.bfloat16).astype(jnp.float32)
        wq = wgt.astype(jnp.bfloat16).astype(jnp.float32)
        y = jax.lax.conv_general_dilated(
            xq, wq, window_strides=(1, 1), padding=((1, 1), (1, 1)),
            dimension_numbers=("NCHW", "OIHW", "NCHW"),
            precision=jax.lax.Precision.HIGHEST)
        return y + bvec[None, :, None, None]

    def bn(x, g, bt):
        mean = jnp.mean(x, axis=(0, 2, 3), keepdims=True)
        var = jnp.mean((x - mean) ** 2, axis=(0, 2, 3), keepdims=True)
        xn = (x - mean) * jax.lax.rsqrt(var + BN_EPS)
        return g[None, :, None, None] * xn + bt[None, :, None, None]

    y1 = jax.nn.relu(bn(conv(x_nchw, params["w1"], params["b1"]), params["g1"], params["bt1"]))
    y2 = jax.nn.relu(bn(conv(y1, params["w2"], params["b2"]), params["g2"], params["bt2"]) + y1)
    return y2


if __name__ == "__main__":
    key = jax.random.PRNGKey(0)
    k_x, k_p = jax.random.split(key)

    B, C_IN, C_OUT, H, W = 2, 4, 8, 16, 16
    x = jax.random.normal(k_x, (B, C_IN, H, W), jnp.float32)
    params = init_params(k_p, C_IN, C_OUT)

    fwd = jax.jit(inital_conv_block)
    out = jax.block_until_ready(fwd(params, x))
    ref = _reference(params, x)

    assert out.shape == (B, C_OUT, H, W)
    max_err = float(jnp.max(jnp.abs(out - ref)))
    assert jnp.allclose(out, ref, atol=2e-3, rtol=2e-3), (
        f"mismatch vs reference (max abs err {max_err})")

    print("KERNEL_OK")
</pallas_src>

<mosaic_0001>
module attributes {stable_mosaic.version = 11 : i64} {
  func.func @_conv_stats_kernel(%arg0: i32, %arg1: memref<16x512xbf16, #tpu.memory_space<vmem>>, %arg2: memref<3x8x16xbf16, #tpu.memory_space<vmem>>, %arg3: memref<2x512xf32, #tpu.memory_space<vmem>>, %arg4: memref<8x512xf32, #tpu.memory_space<vmem>>, %arg5: memref<1x8x1xf32, #tpu.memory_space<vmem>>, %arg6: memref<1x8x1xf32, #tpu.memory_space<vmem>>) attributes {dimension_semantics = [#tpu.dimension_semantics<parallel>], iteration_bounds = array<i64: 1>, scalar_prefetch = 0 : i64, scratch_operands = 0 : i64, tpu.core_type = #tpu.core_type<tc>, window_params = [{transform_indices = @transform_0, window_bounds = array<i64: 16, 512>}, {pipeline_mode = #tpu.pipeline_mode<synchronous>, transform_indices = @transform_1, window_bounds = array<i64: 3, 8, 16>}, {pipeline_mode = #tpu.pipeline_mode<synchronous>, transform_indices = @transform_2, window_bounds = array<i64: 2, 512>}, {transform_indices = @transform_3, window_bounds = array<i64: 8, 512>}, {transform_indices = @transform_4, window_bounds = array<i64: 1, 8, 1>}, {transform_indices = @transform_5, window_bounds = array<i64: 1, 8, 1>}]} {
    %c0 = arith.constant 0 : index
    %c0_0 = arith.constant 0 : index
    %0 = vector.load %arg1[%c0, %c0_0] : memref<16x512xbf16, #tpu.memory_space<vmem>>, vector<16x512xbf16>
    %1 = arith.extf %0 : vector<16x512xbf16> to vector<16x512xf32>
    %c1_i32 = arith.constant 1 : i32
    %2 = tpu.dynamic_rotate %1 by %c1_i32 dim 1 : vector<16x512xf32>, i32 -> vector<16x512xf32>
    %c0_1 = arith.constant 0 : index
    %c0_2 = arith.constant 0 : index
    %3 = vector.load %arg3[%c0_1, %c0_2] : memref<2x512xf32, #tpu.memory_space<vmem>>, vector<1x512xf32>
    %4 = vector.broadcast %3 : vector<1x512xf32> to vector<16x512xf32>
    %5 = arith.mulf %2, %4 : vector<16x512xf32>
    %c511_i32 = arith.constant 511 : i32
    %6 = tpu.dynamic_rotate %1 by %c511_i32 dim 1 : vector<16x512xf32>, i32 -> vector<16x512xf32>
    %c1 = arith.constant 1 : index
    %c0_3 = arith.constant 0 : index
    %7 = vector.load %arg3[%c1, %c0_3] : memref<2x512xf32, #tpu.memory_space<vmem>>, vector<1x512xf32>
    %8 = vector.broadcast %7 : vector<1x512xf32> to vector<16x512xf32>
    %9 = arith.mulf %6, %8 : vector<16x512xf32>
    %c1_4 = arith.constant 1 : index
    %c0_5 = arith.constant 0 : index
    %c0_6 = arith.constant 0 : index
    %10 = vector.load %arg2[%c1_4, %c0_5, %c0_6] : memref<3x8x16xbf16, #tpu.memory_space<vmem>>, vector<1x8x16xbf16>
    %11 = vector.shape_cast %10 : vector<1x8x16xbf16> to vector<8x16xbf16>
    %cst = arith.constant dense<0.000000e+00> : vector<8x512xf32>
    %12 = tpu.matmul %11, %0, %cst {dimension_numbers = #tpu.dot_dimension_numbers<[1], [0], [0], [1], [0, 0, 1, 1], [], []>} : vector<8x16xbf16>, vector<16x512xbf16>, vector<8x512xf32> -> vector<8x512xf32>
    %c0_7 = arith.constant 0 : index
    %c0_8 = arith.constant 0 : index
    %c0_9 = arith.constant 0 : index
    %13 = vector.load %arg2[%c0_7, %c0_8, %c0_9] : memref<3x8x16xbf16, #tpu.memory_space<vmem>>, vector<1x8x16xbf16>
    %14 = vector.shape_cast %13 : vector<1x8x16xbf16> to vector<8x16xbf16>
    %15 = arith.truncf %5 : vector<16x512xf32> to vector<16x512xbf16>
    %cst_10 = arith.constant dense<0.000000e+00> : vector<8x512xf32>
    %16 = tpu.matmul %14, %15, %cst_10 {dimension_numbers = #tpu.dot_dimension_numbers<[1], [0], [0], [1], [0, 0, 1, 1], [], []>} : vector<8x16xbf16>, vector<16x512xbf16>, vector<8x512xf32> -> vector<8x512xf32>
    %17 = arith.addf %12, %16 : vector<8x512xf32>
    %c2 = arith.constant 2 : index
    %c0_11 = arith.constant 0 : index
    %c0_12 = arith.constant 0 : index
    %18 = vector.load %arg2[%c2, %c0_11, %c0_12] : memref<3x8x16xbf16, #tpu.memory_space<vmem>>, vector<1x8x16xbf16>
    %19 = vector.shape_cast %18 : vector<1x8x16xbf16> to vector<8x16xbf16>
    %20 = arith.truncf %9 : vector<16x512xf32> to vector<16x512xbf16>
    %cst_13 = arith.constant dense<0.000000e+00> : vector<8x512xf32>
    %21 = tpu.matmul %19, %20, %cst_13 {dimension_numbers = #tpu.dot_dimension_numbers<[1], [0], [0], [1], [0, 0, 1, 1], [], []>} : vector<8x16xbf16>, vector<16x512xbf16>, vector<8x512xf32> -> vector<8x512xf32>
    %22 = arith.addf %17, %21 : vector<8x512xf32>
    %c0_14 = arith.constant 0 : index
    %c0_15 = arith.constant 0 : index
    %23 = vector.load %arg4[%c0_14, %c0_15] : memref<8x512xf32, #tpu.memory_space<vmem>>, vector<8x512xf32>
    tpu.vector_store %arg4[%c0_14, %c0_15], %22 {strides = array<i32>} : memref<8x512xf32, #tpu.memory_space<vmem>>, vector<8x512xf32>,
    %cst_16 = arith.constant dense<0.000000e+00> : vector<8xf32>
    %24 = vector.multi_reduction <add>, %22, %cst_16 [1] : vector<8x512xf32> to vector<8xf32>
    %25 = vector.shape_cast %24 : vector<8xf32> to vector<8x1xf32>
    %c0_17 = arith.constant 0 : index
    %c0_18 = arith.constant 0 : index
    %c0_19 = arith.constant 0 : index
    %26 = vector.load %arg5[%c0_17, %c0_18, %c0_19] : memref<1x8x1xf32, #tpu.memory_space<vmem>>, vector<1x8x1xf32>
    %27 = vector.shape_cast %26 : vector<1x8x1xf32> to vector<8x1xf32>
    %28 = vector.shape_cast %25 : vector<8x1xf32> to vector<1x8x1xf32>
    tpu.vector_store %arg5[%c0_17, %c0_18, %c0_19], %28 {strides = array<i32>} : memref<1x8x1xf32, #tpu.memory_space<vmem>>, vector<1x8x1xf32>,
    %29 = arith.mulf %22, %22 : vector<8x512xf32>
    %cst_20 = arith.constant dense<0.000000e+00> : vector<8xf32>
    %30 = vector.multi_reduction <add>, %29, %cst_20 [1] : vector<8x512xf32> to vector<8xf32>
    %31 = vector.shape_cast %30 : vector<8xf32> to vector<8x1xf32>
    %c0_21 = arith.constant 0 : index
    %c0_22 = arith.constant 0 : index
    %c0_23 = arith.constant 0 : index
    %32 = vector.load %arg6[%c0_21, %c0_22, %c0_23] : memref<1x8x1xf32, #tpu.memory_space<vmem>>, vector<1x8x1xf32>
    %33 = vector.shape_cast %32 : vector<1x8x1xf32> to vector<8x1xf32>
    %34 = vector.shape_cast %31 : vector<8x1xf32> to vector<1x8x1xf32>
    tpu.vector_store %arg6[%c0_21, %c0_22, %c0_23], %34 {strides = array<i32>} : memref<1x8x1xf32, #tpu.memory_space<vmem>>, vector<1x8x1xf32>,
    return
  }
  func.func @transform_0(%arg0: i32) -> (i32, i32) {
    %c0_i32 = arith.constant 0 : i32
    %c0_i32_0 = arith.constant 0 : i32
    return %c0_i32, %arg0 : i32, i32
  }
  func.func @transform_1(%arg0: i32) -> (i32, i32, i32) {
    %c0_i32 = arith.constant 0 : i32
    %c0_i32_0 = arith.constant 0 : i32
    %c0_i32_1 = arith.constant 0 : i32
    %c0_i32_2 = arith.constant 0 : i32
    return %c0_i32, %c0_i32_0, %c0_i32_1 : i32, i32, i32
  }
  func.func @transform_2(%arg0: i32) -> (i32, i32) {
    %c0_i32 = arith.constant 0 : i32
    %c0_i32_0 = arith.constant 0 : i32
    %c0_i32_1 = arith.constant 0 : i32
    return %c0_i32, %c0_i32_0 : i32, i32
  }
  func.func @transform_3(%arg0: i32) -> (i32, i32) {
    %c0_i32 = arith.constant 0 : i32
    %c0_i32_0 = arith.constant 0 : i32
    return %c0_i32, %arg0 : i32, i32
  }
  func.func @transform_4(%arg0: i32) -> (i32, i32, i32) {
    %c0_i32 = arith.constant 0 : i32
    %c0_i32_0 = arith.constant 0 : i32
    %c0_i32_1 = arith.constant 0 : i32
    return %arg0, %c0_i32, %c0_i32_0 : i32, i32, i32
  }
  func.func @transform_5(%arg0: i32) -> (i32, i32, i32) {
    %c0_i32 = arith.constant 0 : i32
    %c0_i32_0 = arith.constant 0 : i32
    %c0_i32_1 = arith.constant 0 : i32
    return %arg0, %c0_i32, %c0_i32_0 : i32, i32, i32
  }
}

module attributes {stable_mosaic.version = 11 : i64} {
  func.func @_bn_relu_kernel(%arg0: i32, %arg1: memref<8x512xf32, #tpu.memory_space<vmem>>, %arg2: memref<8x1xf32, #tpu.memory_space<vmem>>, %arg3: memref<8x1xf32, #tpu.memory_space<vmem>>, %arg4: memref<8x512xf32, #tpu.memory_space<vmem>>) attributes {dimension_semantics = [#tpu.dimension_semantics<parallel>], iteration_bounds = array<i64: 1>, scalar_prefetch = 0 : i64, scratch_operands = 0 : i64, tpu.core_type = #tpu.core_type<tc>, window_params = [{transform_indices = @transform_0, window_bounds = array<i64: 8, 512>}, {pipeline_mode = #tpu.pipeline_mode<synchronous>, transform_indices = @transform_1, window_bounds = array<i64: 8, 1>}, {pipeline_mode = #tpu.pipeline_mode<synchronous>, transform_indices = @transform_2, window_bounds = array<i64: 8, 1>}, {transform_indices = @transform_3, window_bounds = array<i64: 8, 512>}]} {
    %c0 = arith.constant 0 : index
    %c0_0 = arith.constant 0 : index
    %0 = vector.load %arg1[%c0, %c0_0] : memref<8x512xf32, #tpu.memory_space<vmem>>, vector<8x512xf32>
    %c0_1 = arith.constant 0 : index
    %c0_2 = arith.constant 0 : index
    %1 = vector.load %arg2[%c0_1, %c0_2] : memref<8x1xf32, #tpu.memory_space<vmem>>, vector<8x1xf32>
    %2 = vector.broadcast %1 : vector<8x1xf32> to vector<8x512xf32>
    %3 = arith.mulf %0, %2 : vector<8x512xf32>
    %c0_3 = arith.constant 0 : index
    %c0_4 = arith.constant 0 : index
    %4 = vector.load %arg3[%c0_3, %c0_4] : memref<8x1xf32, #tpu.memory_space<vmem>>, vector<8x1xf32>
    %5 = vector.broadcast %4 : vector<8x1xf32> to vector<8x512xf32>
    %6 = arith.addf %3, %5 : vector<8x512xf32>
    %cst = arith.constant 0.000000e+00 : f32
    %7 = vector.broadcast %cst : f32 to vector<8x512xf32>
    %8 = arith.maximumf %6, %7 : vector<8x512xf32>
    %c0_5 = arith.constant 0 : index
    %c0_6 = arith.constant 0 : index
    %9 = vector.load %arg4[%c0_5, %c0_6] : memref<8x512xf32, #tpu.memory_space<vmem>>, vector<8x512xf32>
    tpu.vector_store %arg4[%c0_5, %c0_6], %8 {strides = array<i32>} : memref<8x512xf32, #tpu.memory_space<vmem>>, vector<8x512xf32>,
    return
  }
  func.func @transform_0(%arg0: i32) -> (i32, i32) {
    %c0_i32 = arith.constant 0 : i32
    %c0_i32_0 = arith.constant 0 : i32
    return %c0_i32, %arg0 : i32, i32
  }
  func.func @transform_1(%arg0: i32) -> (i32, i32) {
    %c0_i32 = arith.constant 0 : i32
    %c0_i32_0 = arith.constant 0 : i32
    %c0_i32_1 = arith.constant 0 : i32
    return %c0_i32, %c0_i32_0 : i32, i32
  }
  func.func @transform_2(%arg0: i32) -> (i32, i32) {
    %c0_i32 = arith.constant 0 : i32
    %c0_i32_0 = arith.constant 0 : i32
    %c0_i32_1 = arith.constant 0 : i32
    return %c0_i32, %c0_i32_0 : i32, i32
  }
  func.func @transform_3(%arg0: i32) -> (i32, i32) {
    %c0_i32 = arith.constant 0 : i32
    %c0_i32_0 = arith.constant 0 : i32
    return %c0_i32, %arg0 : i32, i32
  }
}

module attributes {stable_mosaic.version = 11 : i64} {
  func.func @_bn_res_relu_kernel(%arg0: i32, %arg1: memref<8x512xf32, #tpu.memory_space<vmem>>, %arg2: memref<8x1xf32, #tpu.memory_space<vmem>>, %arg3: memref<8x1xf32, #tpu.memory_space<vmem>>, %arg4: memref<8x512xf32, #tpu.memory_space<vmem>>, %arg5: memref<8x512xf32, #tpu.memory_space<vmem>>) attributes {dimension_semantics = [#tpu.dimension_semantics<parallel>], iteration_bounds = array<i64: 1>, scalar_prefetch = 0 : i64, scratch_operands = 0 : i64, tpu.core_type = #tpu.core_type<tc>, window_params = [{transform_indices = @transform_0, window_bounds = array<i64: 8, 512>}, {pipeline_mode = #tpu.pipeline_mode<synchronous>, transform_indices = @transform_1, window_bounds = array<i64: 8, 1>}, {pipeline_mode = #tpu.pipeline_mode<synchronous>, transform_indices = @transform_2, window_bounds = array<i64: 8, 1>}, {transform_indices = @transform_3, window_bounds = array<i64: 8, 512>}, {transform_indices = @transform_4, window_bounds = array<i64: 8, 512>}]} {
    %c0 = arith.constant 0 : index
    %c0_0 = arith.constant 0 : index
    %0 = vector.load %arg1[%c0, %c0_0] : memref<8x512xf32, #tpu.memory_space<vmem>>, vector<8x512xf32>
    %c0_1 = arith.constant 0 : index
    %c0_2 = arith.constant 0 : index
    %1 = vector.load %arg2[%c0_1, %c0_2] : memref<8x1xf32, #tpu.memory_space<vmem>>, vector<8x1xf32>
    %2 = vector.broadcast %1 : vector<8x1xf32> to vector<8x512xf32>
    %3 = arith.mulf %0, %2 : vector<8x512xf32>
    %c0_3 = arith.constant 0 : index
    %c0_4 = arith.constant 0 : index
    %4 = vector.load %arg3[%c0_3, %c0_4] : memref<8x1xf32, #tpu.memory_space<vmem>>, vector<8x1xf32>
    %5 = vector.broadcast %4 : vector<8x1xf32> to vector<8x512xf32>
    %6 = arith.addf %3, %5 : vector<8x512xf32>
    %c0_5 = arith.constant 0 : index
    %c0_6 = arith.constant 0 : index
    %7 = vector.load %arg4[%c0_5, %c0_6] : memref<8x512xf32, #tpu.memory_space<vmem>>, vector<8x512xf32>
    %8 = arith.addf %6, %7 : vector<8x512xf32>
    %cst = arith.constant 0.000000e+00 : f32
    %9 = vector.broadcast %cst : f32 to vector<8x512xf32>
    %10 = arith.maximumf %8, %9 : vector<8x512xf32>
    %c0_7 = arith.constant 0 : index
    %c0_8 = arith.constant 0 : index
    %11 = vector.load %arg5[%c0_7, %c0_8] : memref<8x512xf32, #tpu.memory_space<vmem>>, vector<8x512xf32>
    tpu.vector_store %arg5[%c0_7, %c0_8], %10 {strides = array<i32>} : memref<8x512xf32, #tpu.memory_space<vmem>>, vector<8x512xf32>,
    return
  }
  func.func @transform_0(%arg0: i32) -> (i32, i32) {
    %c0_i32 = arith.constant 0 : i32
    %c0_i32_0 = arith.constant 0 : i32
    return %c0_i32, %arg0 : i32, i32
  }
  func.func @transform_1(%arg0: i32) -> (i32, i32) {
    %c0_i32 = arith.constant 0 : i32
    %c0_i32_0 = arith.constant 0 : i32
    %c0_i32_1 = arith.constant 0 : i32
    return %c0_i32, %c0_i32_0 : i32, i32
  }
  func.func @transform_2(%arg0: i32) -> (i32, i32) {
    %c0_i32 = arith.constant 0 : i32
    %c0_i32_0 = arith.constant 0 : i32
    %c0_i32_1 = arith.constant 0 : i32
    return %c0_i32, %c0_i32_0 : i32, i32
  }
  func.func @transform_3(%arg0: i32) -> (i32, i32) {
    %c0_i32 = arith.constant 0 : i32
    %c0_i32_0 = arith.constant 0 : i32
    return %c0_i32, %arg0 : i32, i32
  }
  func.func @transform_4(%arg0: i32) -> (i32, i32) {
    %c0_i32 = arith.constant 0 : i32
    %c0_i32_0 = arith.constant 0 : i32
    return %c0_i32, %arg0 : i32, i32
  }
}

module attributes {stable_mosaic.version = 11 : i64} {
  func.func @_conv_stats_kernel(%arg0: i32, %arg1: memref<32x512xbf16, #tpu.memory_space<vmem>>, %arg2: memref<3x8x32xbf16, #tpu.memory_space<vmem>>, %arg3: memref<2x512xf32, #tpu.memory_space<vmem>>, %arg4: memref<8x512xf32, #tpu.memory_space<vmem>>, %arg5: memref<1x8x1xf32, #tpu.memory_space<vmem>>, %arg6: memref<1x8x1xf32, #tpu.memory_space<vmem>>) attributes {dimension_semantics = [#tpu.dimension_semantics<parallel>], iteration_bounds = array<i64: 1>, scalar_prefetch = 0 : i64, scratch_operands = 0 : i64, tpu.core_type = #tpu.core_type<tc>, window_params = [{transform_indices = @transform_0, window_bounds = array<i64: 32, 512>}, {pipeline_mode = #tpu.pipeline_mode<synchronous>, transform_indices = @transform_1, window_bounds = array<i64: 3, 8, 32>}, {pipeline_mode = #tpu.pipeline_mode<synchronous>, transform_indices = @transform_2, window_bounds = array<i64: 2, 512>}, {transform_indices = @transform_3, window_bounds = array<i64: 8, 512>}, {transform_indices = @transform_4, window_bounds = array<i64: 1, 8, 1>}, {transform_indices = @transform_5, window_bounds = array<i64: 1, 8, 1>}]} {
    %c0 = arith.constant 0 : index
    %c0_0 = arith.constant 0 : index
    %0 = vector.load %arg1[%c0, %c0_0] : memref<32x512xbf16, #tpu.memory_space<vmem>>, vector<32x512xbf16>
    %1 = arith.extf %0 : vector<32x512xbf16> to vector<32x512xf32>
    %c1_i32 = arith.constant 1 : i32
    %2 = tpu.dynamic_rotate %1 by %c1_i32 dim 1 : vector<32x512xf32>, i32 -> vector<32x512xf32>
    %c0_1 = arith.constant 0 : index
    %c0_2 = arith.constant 0 : index
    %3 = vector.load %arg3[%c0_1, %c0_2] : memref<2x512xf32, #tpu.memory_space<vmem>>, vector<1x512xf32>
    %4 = vector.broadcast %3 : vector<1x512xf32> to vector<32x512xf32>
    %5 = arith.mulf %2, %4 : vector<32x512xf32>
    %c511_i32 = arith.constant 511 : i32
    %6 = tpu.dynamic_rotate %1 by %c511_i32 dim 1 : vector<32x512xf32>, i32 -> vector<32x512xf32>
    %c1 = arith.constant 1 : index
    %c0_3 = arith.constant 0 : index
    %7 = vector.load %arg3[%c1, %c0_3] : memref<2x512xf32, #tpu.memory_space<vmem>>, vector<1x512xf32>
    %8 = vector.broadcast %7 : vector<1x512xf32> to vector<32x512xf32>
    %9 = arith.mulf %6, %8 : vector<32x512xf32>
    %c1_4 = arith.constant 1 : index
    %c0_5 = arith.constant 0 : index
    %c0_6 = arith.constant 0 : index
    %10 = vector.load %arg2[%c1_4, %c0_5, %c0_6] : memref<3x8x32xbf16, #tpu.memory_space<vmem>>, vector<1x8x32xbf16>
    %11 = vector.shape_cast %10 : vector<1x8x32xbf16> to vector<8x32xbf16>
    %cst = arith.constant dense<0.000000e+00> : vector<8x512xf32>
    %12 = tpu.matmul %11, %0, %cst {dimension_numbers = #tpu.dot_dimension_numbers<[1], [0], [0], [1], [0, 0, 1, 1], [], []>} : vector<8x32xbf16>, vector<32x512xbf16>, vector<8x512xf32> -> vector<8x512xf32>
    %c0_7 = arith.constant 0 : index
    %c0_8 = arith.constant 0 : index
    %c0_9 = arith.constant 0 : index
    %13 = vector.load %arg2[%c0_7, %c0_8, %c0_9] : memref<3x8x32xbf16, #tpu.memory_space<vmem>>, vector<1x8x32xbf16>
    %14 = vector.shape_cast %13 : vector<1x8x32xbf16> to vector<8x32xbf16>
    %15 = arith.truncf %5 : vector<32x512xf32> to vector<32x512xbf16>
    %cst_10 = arith.constant dense<0.000000e+00> : vector<8x512xf32>
    %16 = tpu.matmul %14, %15, %cst_10 {dimension_numbers = #tpu.dot_dimension_numbers<[1], [0], [0], [1], [0, 0, 1, 1], [], []>} : vector<8x32xbf16>, vector<32x512xbf16>, vector<8x512xf32> -> vector<8x512xf32>
    %17 = arith.addf %12, %16 : vector<8x512xf32>
    %c2 = arith.constant 2 : index
    %c0_11 = arith.constant 0 : index
    %c0_12 = arith.constant 0 : index
    %18 = vector.load %arg2[%c2, %c0_11, %c0_12] : memref<3x8x32xbf16, #tpu.memory_space<vmem>>, vector<1x8x32xbf16>
    %19 = vector.shape_cast %18 : vector<1x8x32xbf16> to vector<8x32xbf16>
    %20 = arith.truncf %9 : vector<32x512xf32> to vector<32x512xbf16>
    %cst_13 = arith.constant dense<0.000000e+00> : vector<8x512xf32>
    %21 = tpu.matmul %19, %20, %cst_13 {dimension_numbers = #tpu.dot_dimension_numbers<[1], [0], [0], [1], [0, 0, 1, 1], [], []>} : vector<8x32xbf16>, vector<32x512xbf16>, vector<8x512xf32> -> vector<8x512xf32>
    %22 = arith.addf %17, %21 : vector<8x512xf32>
    %c0_14 = arith.constant 0 : index
    %c0_15 = arith.constant 0 : index
    %23 = vector.load %arg4[%c0_14, %c0_15] : memref<8x512xf32, #tpu.memory_space<vmem>>, vector<8x512xf32>
    tpu.vector_store %arg4[%c0_14, %c0_15], %22 {strides = array<i32>} : memref<8x512xf32, #tpu.memory_space<vmem>>, vector<8x512xf32>,
    %cst_16 = arith.constant dense<0.000000e+00> : vector<8xf32>
    %24 = vector.multi_reduction <add>, %22, %cst_16 [1] : vector<8x512xf32> to vector<8xf32>
    %25 = vector.shape_cast %24 : vector<8xf32> to vector<8x1xf32>
    %c0_17 = arith.constant 0 : index
    %c0_18 = arith.constant 0 : index
    %c0_19 = arith.constant 0 : index
    %26 = vector.load %arg5[%c0_17, %c0_18, %c0_19] : memref<1x8x1xf32, #tpu.memory_space<vmem>>, vector<1x8x1xf32>
    %27 = vector.shape_cast %26 : vector<1x8x1xf32> to vector<8x1xf32>
    %28 = vector.shape_cast %25 : vector<8x1xf32> to vector<1x8x1xf32>
    tpu.vector_store %arg5[%c0_17, %c0_18, %c0_19], %28 {strides = array<i32>} : memref<1x8x1xf32, #tpu.memory_space<vmem>>, vector<1x8x1xf32>,
    %29 = arith.mulf %22, %22 : vector<8x512xf32>
    %cst_20 = arith.constant dense<0.000000e+00> : vector<8xf32>
    %30 = vector.multi_reduction <add>, %29, %cst_20 [1] : vector<8x512xf32> to vector<8xf32>
    %31 = vector.shape_cast %30 : vector<8xf32> to vector<8x1xf32>
    %c0_21 = arith.constant 0 : index
    %c0_22 = arith.constant 0 : index
    %c0_23 = arith.constant 0 : index
    %32 = vector.load %arg6[%c0_21, %c0_22, %c0_23] : memref<1x8x1xf32, #tpu.memory_space<vmem>>, vector<1x8x1xf32>
    %33 = vector.shape_cast %32 : vector<1x8x1xf32> to vector<8x1xf32>
    %34 = vector.shape_cast %31 : vector<8x1xf32> to vector<1x8x1xf32>
    tpu.vector_store %arg6[%c0_21, %c0_22, %c0_23], %34 {strides = array<i32>} : memref<1x8x1xf32, #tpu.memory_space<vmem>>, vector<1x8x1xf32>,
    return
  }
  func.func @transform_0(%arg0: i32) -> (i32, i32) {
    %c0_i32 = arith.constant 0 : i32
    %c0_i32_0 = arith.constant 0 : i32
    return %c0_i32, %arg0 : i32, i32
  }
  func.func @transform_1(%arg0: i32) -> (i32, i32, i32) {
    %c0_i32 = arith.constant 0 : i32
    %c0_i32_0 = arith.constant 0 : i32
    %c0_i32_1 = arith.constant 0 : i32
    %c0_i32_2 = arith.constant 0 : i32
    return %c0_i32, %c0_i32_0, %c0_i32_1 : i32, i32, i32
  }
  func.func @transform_2(%arg0: i32) -> (i32, i32) {
    %c0_i32 = arith.constant 0 : i32
    %c0_i32_0 = arith.constant 0 : i32
    %c0_i32_1 = arith.constant 0 : i32
    return %c0_i32, %c0_i32_0 : i32, i32
  }
  func.func @transform_3(%arg0: i32) -> (i32, i32) {
    %c0_i32 = arith.constant 0 : i32
    %c0_i32_0 = arith.constant 0 : i32
    return %c0_i32, %arg0 : i32, i32
  }
  func.func @transform_4(%arg0: i32) -> (i32, i32, i32) {
    %c0_i32 = arith.constant 0 : i32
    %c0_i32_0 = arith.constant 0 : i32
    %c0_i32_1 = arith.constant 0 : i32
    return %arg0, %c0_i32, %c0_i32_0 : i32, i32, i32
  }
  func.func @transform_5(%arg0: i32) -> (i32, i32, i32) {
    %c0_i32 = arith.constant 0 : i32
    %c0_i32_0 = arith.constant 0 : i32
    %c0_i32_1 = arith.constant 0 : i32
    return %arg0, %c0_i32, %c0_i32_0 : i32, i32, i32
  }
}

</mosaic_0001>

<llo_original>
// kernel: inital_conv_block.5
$region0: #{inital_conv_block.5}
  #allocation0 [shape = 'u32[]', space=smem, size = 0x4, offset = 0x4, fixed_abs, tag = 'smem constant byte address 0x4 - core index']
  #allocation1 [shape = 'u32[144,128]{1,0:T(1,128)}', space=vmem, size = 0x12000, scoped, tag = 'internal scratch']
  %s0 = inlined_call_operand.vmem [shape: f32[8,512], index: 0, kind: input, shape index: {}]
  %s1 = inlined_call_operand.vmem [shape: f32[8,1], index: 1, kind: input, shape index: {}]
  %s2 = inlined_call_operand.vmem [shape: f32[8,1], index: 2, kind: input, shape index: {}]
  %s3 = inlined_call_operand.vmem [shape: f32[8,512], index: 3, kind: output, shape index: {}]
  %s4 = sld [smem:[#allocation0]]
  $region22: #{inital_conv_block.5} parent=0
    _
  %s6 = ssub.s32 1, %s4
  %s7 = scalar_select 0, %s6, %s4
  // Predicated region
  $region2: #{inital_conv_block.5} parent=0 // pred_check
    _
  $region3: #{inital_conv_block.5} parent=0 // pred_check_branch
    %9 = sbr.rel (0) target = $region5
  $region4: #{inital_conv_block.5} parent=0 // pred_region
    _
  $region5: #{inital_conv_block.5} parent=0 // pred_fallthru
    _
  // Predicated region
  $region6: #{inital_conv_block.5} parent=0 // pred_check
    _
  $region7: #{inital_conv_block.5} parent=0 // pred_check_branch
    %11 = sbr.rel (0) target = $region9
  $region8: #{inital_conv_block.5} parent=0 // pred_region
    _
  $region9: #{inital_conv_block.5} parent=0 // pred_fallthru
    _
  // Predicated region
  $region10: #{inital_conv_block.5} parent=0 // pred_check
    _
  $region11: #{inital_conv_block.5} parent=0 // pred_check_branch
    %13 = sbr.rel (0) target = $region13
  $region12: #{inital_conv_block.5} parent=0 // pred_region
    _
  $region13: #{inital_conv_block.5} parent=0 // pred_fallthru
    _
  %v14 = vld [vmem:[%s0] sm:$0xff]
  %v15 = vld [vmem:[%s0 + $0x8] sm:$0xff]
  %v16 = vld [vmem:[%s0 + $0x10] sm:$0xff]
  %v17 = vld [vmem:[%s0 + $0x18] sm:$0xff]
  %v18 = vld [vmem:[%s1] sm:$0xff]
  %20 = vset.pattern.permute.xlu0 0
  %21 = vperm.xlu0 %20, %v18
  %v22 = vpop.permute.xlu0 %21
  %v24 = vmul.f32 %v14, %v22
  %v25 = vmul.f32 %v15, %v22
  %v26 = vmul.f32 %v16, %v22
  %v27 = vmul.f32 %v17, %v22
  %v28 = vld [vmem:[%s2] sm:$0xff]
  %30 = vset.pattern.permute.xlu0 0
  %31 = vperm.xlu0 %30, %v28
  %v32 = vpop.permute.xlu0 %31
  %v34 = vadd.f32 %v24, %v32
  %v35 = vadd.f32 %v25, %v32
  %v36 = vadd.f32 %v26, %v32
  %v37 = vadd.f32 %v27, %v32
  %v38 = vmax.f32 %v34, 0.0
  %v39 = vmax.f32 %v35, 0.0
  %v40 = vmax.f32 %v36, 0.0
  %v41 = vmax.f32 %v37, 0.0
  %42 = vst [vmem:[%s3] sm:$0xff] %v38
  %43 = vst [vmem:[%s3 + $0x8] sm:$0xff] %v39
  %44 = vst [vmem:[%s3 + $0x10] sm:$0xff] %v40
  %45 = vst [vmem:[%s3 + $0x18] sm:$0xff] %v41
  // Predicated region
  $region14: #{inital_conv_block.5} parent=0 // pred_check
    _
  $region15: #{inital_conv_block.5} parent=0 // pred_check_branch
    %47 = sbr.rel (0) target = $region17
  $region16: #{inital_conv_block.5} parent=0 // pred_region
    _
  $region17: #{inital_conv_block.5} parent=0 // pred_fallthru
    _
  // Predicated region
  $region18: #{inital_conv_block.5} parent=0 // pred_check
    _
  $region19: #{inital_conv_block.5} parent=0 // pred_check_branch
    %49 = sbr.rel (0) target = $region21
  $region20: #{inital_conv_block.5} parent=0 // pred_region
    _
  $region21: #{inital_conv_block.5} parent=0 // pred_fallthru
    _

// kernel: inital_conv_block.4
$region0: #{inital_conv_block.4}
  #allocation0 [shape = 'u32[]', space=smem, size = 0x4, offset = 0x4, fixed_abs, tag = 'smem constant byte address 0x4 - core index']
  #allocation1 [shape = 'u32[144,128]{1,0:T(1,128)}', space=vmem, size = 0x12000, scoped, tag = 'internal scratch']
  %s0 = inlined_call_operand.vmem [shape: bf16[16,512], index: 0, kind: input, shape index: {}]
  %s1 = inlined_call_operand.vmem [shape: bf16[3,8,16], index: 1, kind: input, shape index: {}]
  %s2 = inlined_call_operand.vmem [shape: f32[2,512], index: 2, kind: input, shape index: {}]
  %s3 = inlined_call_operand.vmem [shape: f32[8,512], index: 3, kind: output, shape index: {0}]
  %s4 = inlined_call_operand.vmem [shape: f32[1,8,1], index: 4, kind: output, shape index: {1}]
  %s5 = inlined_call_operand.vmem [shape: f32[1,8,1], index: 5, kind: output, shape index: {2}]
  %6 = xla_tuple %s3, %s4, %s5
  %s7 = sld [smem:[#allocation0]]
  $region38: #{inital_conv_block.4} parent=0
    _
  %s9 = ssub.s32 1, %s7
  %s10 = scalar_select 0, %s9, %s7
  // Predicated region
  $region2: #{inital_conv_block.4} parent=0 // pred_check
    _
  $region3: #{inital_conv_block.4} parent=0 // pred_check_branch
    %12 = sbr.rel (0) target = $region5
  $region4: #{inital_conv_block.4} parent=0 // pred_region
    _
  $region5: #{inital_conv_block.4} parent=0 // pred_fallthru
    _
  // Predicated region
  $region6: #{inital_conv_block.4} parent=0 // pred_check
    _
  $region7: #{inital_conv_block.4} parent=0 // pred_check_branch
    %14 = sbr.rel (0) target = $region9
  $region8: #{inital_conv_block.4} parent=0 // pred_region
    _
  $region9: #{inital_conv_block.4} parent=0 // pred_fallthru
    _
  // Predicated region
  $region10: #{inital_conv_block.4} parent=0 // pred_check
    _
  $region11: #{inital_conv_block.4} parent=0 // pred_check_branch
    %16 = sbr.rel (0) target = $region13
  $region12: #{inital_conv_block.4} parent=0 // pred_region
    _
  $region13: #{inital_conv_block.4} parent=0 // pred_fallthru
    _
  %v18 = vld [vmem:[%s0] sm:$0xff]
  %v19 = vld [vmem:[%s0 + $0x8] sm:$0xff]
  %v20 = vld [vmem:[%s0 + $0x10] sm:$0xff]
  %v21 = vld [vmem:[%s0 + $0x18] sm:$0xff]
  %v22 = vunpack.c.l.bf16 %v18
  %v23 = vunpack.c.h.bf16 %v18
  %v24 = vunpack.c.l.bf16 %v19
  %v25 = vunpack.c.h.bf16 %v19
  %v26 = vunpack.c.l.bf16 %v20
  %v27 = vunpack.c.h.bf16 %v20
  %v28 = vunpack.c.l.bf16 %v21
  %v29 = vunpack.c.h.bf16 %v21
  %30 = vrot.lane.b32.xlu0 %v22, 1
  %v31 = vpop.permute.xlu0 %30
  %32 = vrot.lane.b32.xlu0 %v26, 1
  %v33 = vpop.permute.xlu0 %32
  %34 = vrot.lane.b32.xlu0 %v23, 1
  %v35 = vpop.permute.xlu0 %34
  %36 = vrot.lane.b32.xlu0 %v27, 1
  %v37 = vpop.permute.xlu0 %36
  %38 = vrot.lane.b32.xlu0 %v24, 1
  %v39 = vpop.permute.xlu0 %38
  %40 = vrot.lane.b32.xlu0 %v28, 1
  %v41 = vpop.permute.xlu0 %40
  %42 = vrot.lane.b32.xlu0 %v25, 1
  %v43 = vpop.permute.xlu0 %42
  %44 = vrot.lane.b32.xlu0 %v29, 1
  %v45 = vpop.permute.xlu0 %44
  %v46 = vlaneseq
  %v47 = vand.u32 %v46, 127
  %vm48 = vcmp.lt.s32.totalorder %v47, 1
  %v49 = vsel %vm48, %v39, %v43
  %v50 = vsel %vm48, %v41, %v45
  %v51 = vsel %vm48, %v35, %v39
  %v52 = vsel %vm48, %v37, %v41
  %v53 = vsel %vm48, %v31, %v35
  %v54 = vsel %vm48, %v33, %v37
  %v55 = vsel %vm48, %v43, %v31
  %v56 = vsel %vm48, %v45, %v33
  %v57 = vld [vmem:[%s2] ss:$2 sm:$0xf]
  %v59 = vlaneseq
  %v60 = vshrl.u32 %v59, 7
  %v61 = vsub.s32 0, %v60
  %v62 = vrot.slane %v57, %v61
  %v63 = vlaneseq
  %v64 = vshrl.u32 %v63, 7
  %v65 = vsub.s32 1, %v64
  %v66 = vrot.slane %v57, %v65
  %v67 = vlaneseq
  %v68 = vshrl.u32 %v67, 7
  %v69 = vsub.s32 2, %v68
  %v70 = vrot.slane %v57, %v69
  %v71 = vlaneseq
  %v72 = vshrl.u32 %v71, 7
  %v73 = vsub.s32 3, %v72
  %v74 = vrot.slane %v57, %v73
  %v79 = vmul.f32 %v55, %v62
  %v80 = vmul.f32 %v53, %v66
  %v81 = vmul.f32 %v51, %v70
  %v82 = vmul.f32 %v49, %v74
  %v83 = vmul.f32 %v56, %v62
  %v84 = vmul.f32 %v54, %v66
  %v85 = vmul.f32 %v52, %v70
  %v86 = vmul.f32 %v50, %v74
  %87 = vrot.lane.b32.xlu0 %v22, 127
  %v88 = vpop.permute.xlu0 %87
  %89 = vrot.lane.b32.xlu0 %v26, 127
  %v90 = vpop.permute.xlu0 %89
  %91 = vrot.lane.b32.xlu0 %v23, 127
  %v92 = vpop.permute.xlu0 %91
  %93 = vrot.lane.b32.xlu0 %v27, 127
  %v94 = vpop.permute.xlu0 %93
  %95 = vrot.lane.b32.xlu0 %v24, 127
  %v96 = vpop.permute.xlu0 %95
  %97 = vrot.lane.b32.xlu0 %v28, 127
  %v98 = vpop.permute.xlu0 %97
  %99 = vrot.lane.b32.xlu0 %v25, 127
  %v100 = vpop.permute.xlu0 %99
  %101 = vrot.lane.b32.xlu0 %v29, 127
  %v102 = vpop.permute.xlu0 %101
  %vm103 = vcmp.lt.s32.totalorder %v47, 127
  %v104 = vsel %vm103, %v96, %v100
  %v105 = vsel %vm103, %v98, %v102
  %v106 = vsel %vm103, %v92, %v96
  %v107 = vsel %vm103, %v94, %v98
  %v108 = vsel %vm103, %v88, %v92
  %v109 = vsel %vm103, %v90, %v94
  %v110 = vsel %vm103, %v100, %v88
  %v111 = vsel %vm103, %v102, %v90
  %s112 = scalar_lea.vmem %s2, 1
  %v113 = vld [vmem:[%s112] ss:$2 sm:$0xf]
  %v115 = vlaneseq
  %v116 = vshrl.u32 %v115, 7
  %v117 = vsub.s32 0, %v116
  %v118 = vrot.slane %v113, %v117
  %v119 = vlaneseq
  %v120 = vshrl.u32 %v119, 7
  %v121 = vsub.s32 1, %v120
  %v122 = vrot.slane %v113, %v121
  %v123 = vlaneseq
  %v124 = vshrl.u32 %v123, 7
  %v125 = vsub.s32 2, %v124
  %v126 = vrot.slane %v113, %v125
  %v127 = vlaneseq
  %v128 = vshrl.u32 %v127, 7
  %v129 = vsub.s32 3, %v128
  %v130 = vrot.slane %v113, %v129
  %v135 = vmul.f32 %v108, %v118
  %v136 = vmul.f32 %v106, %v122
  %v137 = vmul.f32 %v104, %v126
  %v138 = vmul.f32 %v110, %v130
  %v139 = vmul.f32 %v109, %v118
  %v140 = vmul.f32 %v107, %v122
  %v141 = vmul.f32 %v105, %v126
  %v142 = vmul.f32 %v111, %v130
  %s143 = scalar_lea.vmem %s1, 4
  %v144 = vld [vmem:[%s143] sm:$0xf]
  %v145 = vld [vmem:[%s1] sm:$0xf]
  %v146 = vpack.c.bf16 %v83, %v79
  %v147 = vpack.c.bf16 %v84, %v80
  %v148 = vpack.c.bf16 %v85, %v81
  %v149 = vpack.c.bf16 %v86, %v82
  %vm150 = vcmask 130048
  %v152 = vsel %vm150, %v145, 0
  %154 = vmatprep.subr.bf16.mxu0 %v147
  %155 = vmatpush1.bf16.msra.mxu0 %v146
  %156 = vmatprep.subr.bf16.mxu0 0
  %157 = vmatpush1.bf16.msra.mxu0 0
  %158 = vmatprep.subr.bf16.mxu0 0
  %159 = vmatpush1.bf16.msra.mxu0 0
  %160 = vmatprep.subr.bf16.mxu0 0
  %161 = vmatpush1.bf16.msra.mxu0 0
  %162 = vmatprep.subr.bf16.mxu0 0
  %163 = vmatpush1.bf16.msra.mxu0 0
  %164 = vmatprep.subr.bf16.mxu0 0
  %165 = vmatpush1.bf16.msra.mxu0 0
  %166 = vmatprep.subr.bf16.mxu0 0
  %167 = vmatpush1.bf16.msra.mxu0 0
  %168 = vmatprep.subr.bf16.mxu0 0
  %169 = vmatpush1.bf16.msra.mxu0 0
  %170 = vmatprep.subr.bf16.mxu0 0
  %171 = vmatpush1.bf16.msra.mxu0 0
  %172 = vmatprep.subr.bf16.mxu0 0
  %173 = vmatpush1.bf16.msra.mxu0 0
  %174 = vmatprep.subr.bf16.mxu0 0
  %175 = vmatpush1.bf16.msra.mxu0 0
  %176 = vmatprep.subr.bf16.mxu0 0
  %177 = vmatpush1.bf16.msra.mxu0 0
  %178 = vmatprep.subr.bf16.mxu0 0
  %179 = vmatpush1.bf16.msra.mxu0 0
  %180 = vmatprep.subr.bf16.mxu0 0
  %181 = vmatpush1.bf16.msra.mxu0 0
  %182 = vmatprep.subr.bf16.mxu0 0
  %183 = vmatpush1.bf16.msra.mxu0 0
  %184 = vmatprep.subr.bf16.mxu0 0
  %185 = vmatpush1.bf16.msra.mxu0 0
  %186 = vmatprep.mubr.bf16.mxu0 0
  %187 = vmatmul.mubr.bf16.gmra.mrb[0].mxu0 %v152
  %v188 = vpop.f32.mrb[0].mxu0
  %v189 = vadd.f32 0.0, %v188
  %v190 = vpop.f32.mrb[0].mxu0
  %v191 = vadd.f32 0.0, %v190
  %v192 = vpop.f32.mrb[0].mxu0
  %v193 = vpop.f32.mrb[0].mxu0
  %194 = vdwg.mxu0
  %195 = vmatprep.subr.bf16.mxu0 %v149
  %196 = vmatpush1.bf16.msra.mxu0 %v148
  %197 = vmatprep.subr.bf16.mxu0 0
  %198 = vmatpush1.bf16.msra.mxu0 0
  %199 = vmatprep.subr.bf16.mxu0 0
  %200 = vmatpush1.bf16.msra.mxu0 0
  %201 = vmatprep.subr.bf16.mxu0 0
  %202 = vmatpush1.bf16.msra.mxu0 0
  %203 = vmatprep.subr.bf16.mxu0 0
  %204 = vmatpush1.bf16.msra.mxu0 0
  %205 = vmatprep.subr.bf16.mxu0 0
  %206 = vmatpush1.bf16.msra.mxu0 0
  %207 = vmatprep.subr.bf16.mxu0 0
  %208 = vmatpush1.bf16.msra.mxu0 0
  %209 = vmatprep.subr.bf16.mxu0 0
  %210 = vmatpush1.bf16.msra.mxu0 0
  %211 = vmatprep.subr.bf16.mxu0 0
  %212 = vmatpush1.bf16.msra.mxu0 0
  %213 = vmatprep.subr.bf16.mxu0 0
  %214 = vmatpush1.bf16.msra.mxu0 0
  %215 = vmatprep.subr.bf16.mxu0 0
  %216 = vmatpush1.bf16.msra.mxu0 0
  %217 = vmatprep.subr.bf16.mxu0 0
  %218 = vmatpush1.bf16.msra.mxu0 0
  %219 = vmatprep.subr.bf16.mxu0 0
  %220 = vmatpush1.bf16.msra.mxu0 0
  %221 = vmatprep.subr.bf16.mxu0 0
  %222 = vmatpush1.bf16.msra.mxu0 0
  %223 = vmatprep.subr.bf16.mxu0 0
  %224 = vmatpush1.bf16.msra.mxu0 0
  %225 = vmatprep.subr.bf16.mxu0 0
  %226 = vmatpush1.bf16.msra.mxu0 0
  %227 = vmatprep.mubr.bf16.mxu0 0
  %228 = vmatmul.mubr.bf16.gmra.mrb[0].mxu0 %v152
  %v229 = vpop.f32.mrb[0].mxu0
  %v230 = vadd.f32 0.0, %v229
  %v231 = vpop.f32.mrb[0].mxu0
  %v232 = vadd.f32 0.0, %v231
  %v233 = vpop.f32.mrb[0].mxu0
  %v234 = vpop.f32.mrb[0].mxu0
  %235 = vdwg.mxu0
  %v240 = vunpack.c.l.b16 %v18
  %v241 = vunpack.c.h.b16 %v18
  %v242 = vunpack.c.l.b16 %v19
  %v243 = vunpack.c.h.b16 %v19
  %v244 = vunpack.c.l.b16 %v20
  %v245 = vunpack.c.h.b16 %v20
  %v246 = vunpack.c.l.b16 %v21
  %v247 = vunpack.c.h.b16 %v21
  %v248 = vpack.c.b16 %v244, %v240
  %v249 = vpack.c.b16 %v245, %v241
  %v250 = vpack.c.b16 %v246, %v242
  %v251 = vpack.c.b16 %v247, %v243
  %v257 = vsel %vm150, %v144, 0
  %259 = vmatprep.subr.bf16.mxu0 %v249
  %260 = vmatpush1.bf16.msra.mxu0 %v248
  %261 = vmatprep.subr.bf16.mxu0 0
  %262 = vmatpush1.bf16.msra.mxu0 0
  %263 = vmatprep.subr.bf16.mxu0 0
  %264 = vmatpush1.bf16.msra.mxu0 0
  %265 = vmatprep.subr.bf16.mxu0 0
  %266 = vmatpush1.bf16.msra.mxu0 0
  %267 = vmatprep.subr.bf16.mxu0 0
  %268 = vmatpush1.bf16.msra.mxu0 0
  %269 = vmatprep.subr.bf16.mxu0 0
  %270 = vmatpush1.bf16.msra.mxu0 0
  %271 = vmatprep.subr.bf16.mxu0 0
  %272 = vmatpush1.bf16.msra.mxu0 0
  %273 = vmatprep.subr.bf16.mxu0 0
  %274 = vmatpush1.bf16.msra.mxu0 0
  %275 = vmatprep.subr.bf16.mxu0 0
  %276 = vmatpush1.bf16.msra.mxu0 0
  %277 = vmatprep.subr.bf16.mxu0 0
  %278 = vmatpush1.bf16.msra.mxu0 0
  %279 = vmatprep.subr.bf16.mxu0 0
  %280 = vmatpush1.bf16.msra.mxu0 0
  %281 = vmatprep.subr.bf16.mxu0 0
  %282 = vmatpush1.bf16.msra.mxu0 0
  %283 = vmatprep.subr.bf16.mxu0 0
  %284 = vmatpush1.bf16.msra.mxu0 0
  %285 = vmatprep.subr.bf16.mxu0 0
  %286 = vmatpush1.bf16.msra.mxu0 0
  %287 = vmatprep.subr.bf16.mxu0 0
  %288 = vmatpush1.bf16.msra.mxu0 0
  %289 = vmatprep.subr.bf16.mxu0 0
  %290 = vmatpush1.bf16.msra.mxu0 0
  %291 = vmatprep.mubr.bf16.mxu0 0
  %292 = vmatmul.mubr.bf16.gmra.mrb[0].mxu0 %v257
  %v293 = vpop.f32.mrb[0].mxu0
  %v294 = vadd.f32 %v189, %v293
  %v295 = vpop.f32.mrb[0].mxu0
  %v296 = vadd.f32 %v191, %v295
  %v297 = vpop.f32.mrb[0].mxu0
  %v298 = vpop.f32.mrb[0].mxu0
  %299 = vdwg.mxu0
  %300 = vmatprep.subr.bf16.mxu0 %v251
  %301 = vmatpush1.bf16.msra.mxu0 %v250
  %302 = vmatprep.subr.bf16.mxu0 0
  %303 = vmatpush1.bf16.msra.mxu0 0
  %304 = vmatprep.subr.bf16.mxu0 0
  %305 = vmatpush1.bf16.msra.mxu0 0
  %306 = vmatprep.subr.bf16.mxu0 0
  %307 = vmatpush1.bf16.msra.mxu0 0
  %308 = vmatprep.subr.bf16.mxu0 0
  %309 = vmatpush1.bf16.msra.mxu0 0
  %310 = vmatprep.subr.bf16.mxu0 0
  %311 = vmatpush1.bf16.msra.mxu0 0
  %312 = vmatprep.subr.bf16.mxu0 0
  %313 = vmatpush1.bf16.msra.mxu0 0
  %314 = vmatprep.subr.bf16.mxu0 0
  %315 = vmatpush1.bf16.msra.mxu0 0
  %316 = vmatprep.subr.bf16.mxu0 0
  %317 = vmatpush1.bf16.msra.mxu0 0
  %318 = vmatprep.subr.bf16.mxu0 0
  %319 = vmatpush1.bf16.msra.mxu0 0
  %320 = vmatprep.subr.bf16.mxu0 0
  %321 = vmatpush1.bf16.msra.mxu0 0
  %322 = vmatprep.subr.bf16.mxu0 0
  %323 = vmatpush1.bf16.msra.mxu0 0
  %324 = vmatprep.subr.bf16.mxu0 0
  %325 = vmatpush1.bf16.msra.mxu0 0
  %326 = vmatprep.subr.bf16.mxu0 0
  %327 = vmatpush1.bf16.msra.mxu0 0
  %328 = vmatprep.subr.bf16.mxu0 0
  %329 = vmatpush1.bf16.msra.mxu0 0
  %330 = vmatprep.subr.bf16.mxu0 0
  %331 = vmatpush1.bf16.msra.mxu0 0
  %332 = vmatprep.mubr.bf16.mxu0 0
  %333 = vmatmul.mubr.bf16.gmra.mrb[0].mxu0 %v257
  %v334 = vpop.f32.mrb[0].mxu0
  %v335 = vadd.f32 %v230, %v334
  %v336 = vpop.f32.mrb[0].mxu0
  %v337 = vadd.f32 %v232, %v336
  %v338 = vpop.f32.mrb[0].mxu0
  %v339 = vpop.f32.mrb[0].mxu0
  %340 = vdwg.mxu0
  %s341 = scalar_lea.vmem %s1, 8
  %v342 = vld [vmem:[%s341] sm:$0xf]
  %v343 = vpack.c.bf16 %v139, %v135
  %v344 = vpack.c.bf16 %v140, %v136
  %v345 = vpack.c.bf16 %v141, %v137
  %v346 = vpack.c.bf16 %v142, %v138
  %v348 = vsel %vm150, %v342, 0
  %350 = vmatprep.subr.bf16.mxu0 %v344
  %351 = vmatpush1.bf16.msra.mxu0 %v343
  %352 = vmatprep.subr.bf16.mxu0 0
  %353 = vmatpush1.bf16.msra.mxu0 0
  %354 = vmatprep.subr.bf16.mxu0 0
  %355 = vmatpush1.bf16.msra.mxu0 0
  %356 = vmatprep.subr.bf16.mxu0 0
  %357 = vmatpush1.bf16.msra.mxu0 0
  %358 = vmatprep.subr.bf16.mxu0 0
  %359 = vmatpush1.bf16.msra.mxu0 0
  %360 = vmatprep.subr.bf16.mxu0 0
  %361 = vmatpush1.bf16.msra.mxu0 0
  %362 = vmatprep.subr.bf16.mxu0 0
  %363 = vmatpush1.bf16.msra.mxu0 0
  %364 = vmatprep.subr.bf16.mxu0 0
  %365 = vmatpush1.bf16.msra.mxu0 0
  %366 = vmatprep.subr.bf16.mxu0 0
  %367 = vmatpush1.bf16.msra.mxu0 0
  %368 = vmatprep.subr.bf16.mxu0 0
  %369 = vmatpush1.bf16.msra.mxu0 0
  %370 = vmatprep.subr.bf16.mxu0 0
  %371 = vmatpush1.bf16.msra.mxu0 0
  %372 = vmatprep.subr.bf16.mxu0 0
  %373 = vmatpush1.bf16.msra.mxu0 0
  %374 = vmatprep.subr.bf16.mxu0 0
  %375 = vmatpush1.bf16.msra.mxu0 0
  %376 = vmatprep.subr.bf16.mxu0 0
  %377 = vmatpush1.bf16.msra.mxu0 0
  %378 = vmatprep.subr.bf16.mxu0 0
  %379 = vmatpush1.bf16.msra.mxu0 0
  %380 = vmatprep.subr.bf16.mxu0 0
  %381 = vmatpush1.bf16.msra.mxu0 0
  %382 = vmatprep.mubr.bf16.mxu0 0
  %383 = vmatmul.mubr.bf16.gmra.mrb[0].mxu0 %v348
  %v384 = vpop.f32.mrb[0].mxu0
  %v385 = vadd.f32 0.0, %v384
  %v386 = vpop.f32.mrb[0].mxu0
  %v387 = vadd.f32 0.0, %v386
  %v388 = vpop.f32.mrb[0].mxu0
  %v389 = vpop.f32.mrb[0].mxu0
  %390 = vdwg.mxu0
  %391 = vmatprep.subr.bf16.mxu0 %v346
  %392 = vmatpush1.bf16.msra.mxu0 %v345
  %393 = vmatprep.subr.bf16.mxu0 0
  %394 = vmatpush1.bf16.msra.mxu0 0
  %395 = vmatprep.subr.bf16.mxu0 0
  %396 = vmatpush1.bf16.msra.mxu0 0
  %397 = vmatprep.subr.bf16.mxu0 0
  %398 = vmatpush1.bf16.msra.mxu0 0
  %399 = vmatprep.subr.bf16.mxu0 0
  %400 = vmatpush1.bf16.msra.mxu0 0
  %401 = vmatprep.subr.bf16.mxu0 0
  %402 = vmatpush1.bf16.msra.mxu0 0
  %403 = vmatprep.subr.bf16.mxu0 0
  %404 = vmatpush1.bf16.msra.mxu0 0
  %405 = vmatprep.subr.bf16.mxu0 0
  %406 = vmatpush1.bf16.msra.mxu0 0
  %407 = vmatprep.subr.bf16.mxu0 0
  %408 = vmatpush1.bf16.msra.mxu0 0
  %409 = vmatprep.subr.bf16.mxu0 0
  %410 = vmatpush1.bf16.msra.mxu0 0
  %411 = vmatprep.subr.bf16.mxu0 0
  %412 = vmatpush1.bf16.msra.mxu0 0
  %413 = vmatprep.subr.bf16.mxu0 0
  %414 = vmatpush1.bf16.msra.mxu0 0
  %415 = vmatprep.subr.bf16.mxu0 0
  %416 = vmatpush1.bf16.msra.mxu0 0
  %417 = vmatprep.subr.bf16.mxu0 0
  %418 = vmatpush1.bf16.msra.mxu0 0
  %419 = vmatprep.subr.bf16.mxu0 0
  %420 = vmatpush1.bf16.msra.mxu0 0
  %421 = vmatprep.subr.bf16.mxu0 0
  %422 = vmatpush1.bf16.msra.mxu0 0
  %423 = vmatprep.mubr.bf16.mxu0 0
  %424 = vmatmul.mubr.bf16.gmra.mrb[0].mxu0 %v348
  %v425 = vpop.f32.mrb[0].mxu0
  %v426 = vadd.f32 0.0, %v425
  %v427 = vpop.f32.mrb[0].mxu0
  %v428 = vadd.f32 0.0, %v427
  %v429 = vpop.f32.mrb[0].mxu0
  %v430 = vpop.f32.mrb[0].mxu0
  %431 = vdwg.mxu0
  %v432 = vadd.f32 %v294, %v385
  %v433 = vadd.f32 %v296, %v387
  %v434 = vadd.f32 %v335, %v426
  %v435 = vadd.f32 %v337, %v428
  %436 = vst [vmem:[%s3] sm:$0xff] %v432
  %437 = vst [vmem:[%s3 + $0x8] sm:$0xff] %v433
  %438 = vst [vmem:[%s3 + $0x10] sm:$0xff] %v434
  %439 = vst [vmem:[%s3 + $0x18] sm:$0xff] %v435
  %v440 = vadd.f32 %v432, %v433
  %v441 = vadd.f32 %v440, %v434
  %v442 = vadd.f32 %v441, %v435
  %443 = vadd.xlane.f32.xlu0 %v442
  %v444 = vpop.xlane.xlu0 %443
  %vm445 = vcmask 7168
  %446 = vst.msk [vmem:[%s4] sm:$0xff] %vm445, %v444
  %v447 = vmul.f32 %v432, %v432
  %v448 = vmul.f32 %v433, %v433
  %v449 = vmul.f32 %v434, %v434
  %v450 = vmul.f32 %v435, %v435
  %v451 = vadd.f32 %v447, %v448
  %v452 = vadd.f32 %v451, %v449
  %v453 = vadd.f32 %v452, %v450
  %454 = vadd.xlane.f32.xlu0 %v453
  %v455 = vpop.xlane.xlu0 %454
  %456 = vst.msk [vmem:[%s5] sm:$0xff] %vm445, %v455
  // Predicated region
  $region14: #{inital_conv_block.4} parent=0 // pred_check
    _
  $region15: #{inital_conv_block.4} parent=0 // pred_check_branch
    %458 = sbr.rel (0) target = $region17
  $region16: #{inital_conv_block.4} parent=0 // pred_region
    _
  $region17: #{inital_conv_block.4} parent=0 // pred_fallthru
    _
  // Predicated region
  $region18: #{inital_conv_block.4} parent=0 // pred_check
    _
  $region19: #{inital_conv_block.4} parent=0 // pred_check_branch
    %460 = sbr.rel (0) target = $region21
  $region20: #{inital_conv_block.4} parent=0 // pred_region
    _
  $region21: #{inital_conv_block.4} parent=0 // pred_fallthru
    _
  // Predicated region
  $region22: #{inital_conv_block.4} parent=0 // pred_check
    _
  $region23: #{inital_conv_block.4} parent=0 // pred_check_branch
    %462 = sbr.rel (0) target = $region25
  $region24: #{inital_conv_block.4} parent=0 // pred_region
    _
  $region25: #{inital_conv_block.4} parent=0 // pred_fallthru
    _
  // Predicated region
  $region26: #{inital_conv_block.4} parent=0 // pred_check
    _
  $region27: #{inital_conv_block.4} parent=0 // pred_check_branch
    %464 = sbr.rel (0) target = $region29
  $region28: #{inital_conv_block.4} parent=0 // pred_region
    _
  $region29: #{inital_conv_block.4} parent=0 // pred_fallthru
    _
  // Predicated region
  $region30: #{inital_conv_block.4} parent=0 // pred_check
    _
  $region31: #{inital_conv_block.4} parent=0 // pred_check_branch
    %466 = sbr.rel (0) target = $region33
  $region32: #{inital_conv_block.4} parent=0 // pred_region
    _
  $region33: #{inital_conv_block.4} parent=0 // pred_fallthru
    _
  // Predicated region
  $region34: #{inital_conv_block.4} parent=0 // pred_check
    _
  $region35: #{inital_conv_block.4} parent=0 // pred_check_branch
    %468 = sbr.rel (0) target = $region37
  $region36: #{inital_conv_block.4} parent=0 // pred_region
    _
  $region37: #{inital_conv_block.4} parent=0 // pred_fallthru
    _

// kernel: inital_conv_block.7
$region0: #{inital_conv_block.7}
  #allocation0 [shape = 'u32[]', space=smem, size = 0x4, offset = 0x4, fixed_abs, tag = 'smem constant byte address 0x4 - core index']
  #allocation1 [shape = 'u32[144,128]{1,0:T(1,128)}', space=vmem, size = 0x12000, scoped, tag = 'internal scratch']
  %s0 = inlined_call_operand.vmem [shape: f32[8,512], index: 0, kind: input, shape index: {}]
  %s1 = inlined_call_operand.vmem [shape: f32[8,1], index: 1, kind: input, shape index: {}]
  %s2 = inlined_call_operand.vmem [shape: f32[8,1], index: 2, kind: input, shape index: {}]
  %s3 = inlined_call_operand.vmem [shape: f32[8,512], index: 3, kind: input, shape index: {}]
  %s4 = inlined_call_operand.vmem [shape: f32[8,512], index: 4, kind: output, shape index: {}]
  %s5 = sld [smem:[#allocation0]]
  $region26: #{inital_conv_block.7} parent=0
    _
  %s7 = ssub.s32 1, %s5
  %s8 = scalar_select 0, %s7, %s5
  // Predicated region
  $region2: #{inital_conv_block.7} parent=0 // pred_check
    _
  $region3: #{inital_conv_block.7} parent=0 // pred_check_branch
    %10 = sbr.rel (0) target = $region5
  $region4: #{inital_conv_block.7} parent=0 // pred_region
    _
  $region5: #{inital_conv_block.7} parent=0 // pred_fallthru
    _
  // Predicated region
  $region6: #{inital_conv_block.7} parent=0 // pred_check
    _
  $region7: #{inital_conv_block.7} parent=0 // pred_check_branch
    %12 = sbr.rel (0) target = $region9
  $region8: #{inital_conv_block.7} parent=0 // pred_region
    _
  $region9: #{inital_conv_block.7} parent=0 // pred_fallthru
    _
  // Predicated region
  $region10: #{inital_conv_block.7} parent=0 // pred_check
    _
  $region11: #{inital_conv_block.7} parent=0 // pred_check_branch
    %14 = sbr.rel (0) target = $region13
  $region12: #{inital_conv_block.7} parent=0 // pred_region
    _
  $region13: #{inital_conv_block.7} parent=0 // pred_fallthru
    _
  // Predicated region
  $region14: #{inital_conv_block.7} parent=0 // pred_check
    _
  $region15: #{inital_conv_block.7} parent=0 // pred_check_branch
    %16 = sbr.rel (0) target = $region17
  $region16: #{inital_conv_block.7} parent=0 // pred_region
    _
  $region17: #{inital_conv_block.7} parent=0 // pred_fallthru
    _
  %v17 = vld [vmem:[%s0] sm:$0xff]
  %v18 = vld [vmem:[%s0 + $0x8] sm:$0xff]
  %v19 = vld [vmem:[%s0 + $0x10] sm:$0xff]
  %v20 = vld [vmem:[%s0 + $0x18] sm:$0xff]
  %v21 = vld [vmem:[%s1] sm:$0xff]
  %23 = vset.pattern.permute.xlu0 0
  %24 = vperm.xlu0 %23, %v21
  %v25 = vpop.permute.xlu0 %24
  %v27 = vmul.f32 %v17, %v25
  %v28 = vmul.f32 %v18, %v25
  %v29 = vmul.f32 %v19, %v25
  %v30 = vmul.f32 %v20, %v25
  %v31 = vld [vmem:[%s2] sm:$0xff]
  %33 = vset.pattern.permute.xlu0 0
  %34 = vperm.xlu0 %33, %v31
  %v35 = vpop.permute.xlu0 %34
  %v37 = vadd.f32 %v27, %v35
  %v38 = vadd.f32 %v28, %v35
  %v39 = vadd.f32 %v29, %v35
  %v40 = vadd.f32 %v30, %v35
  %v41 = vld [vmem:[%s3] sm:$0xff]
  %v42 = vld [vmem:[%s3 + $0x8] sm:$0xff]
  %v43 = vld [vmem:[%s3 + $0x10] sm:$0xff]
  %v44 = vld [vmem:[%s3 + $0x18] sm:$0xff]
  %v45 = vadd.f32 %v37, %v41
  %v46 = vadd.f32 %v38, %v42
  %v47 = vadd.f32 %v39, %v43
  %v48 = vadd.f32 %v40, %v44
  %v49 = vmax.f32 %v45, 0.0
  %v50 = vmax.f32 %v46, 0.0
  %v51 = vmax.f32 %v47, 0.0
  %v52 = vmax.f32 %v48, 0.0
  %53 = vst [vmem:[%s4] sm:$0xff] %v49
  %54 = vst [vmem:[%s4 + $0x8] sm:$0xff] %v50
  %55 = vst [vmem:[%s4 + $0x10] sm:$0xff] %v51
  %56 = vst [vmem:[%s4 + $0x18] sm:$0xff] %v52
  // Predicated region
  $region18: #{inital_conv_block.7} parent=0 // pred_check
    _
  $region19: #{inital_conv_block.7} parent=0 // pred_check_branch
    %58 = sbr.rel (0) target = $region21
  $region20: #{inital_conv_block.7} parent=0 // pred_region
    _
  $region21: #{inital_conv_block.7} parent=0 // pred_fallthru
    _
  // Predicated region
  $region22: #{inital_conv_block.7} parent=0 // pred_check
    _
  $region23: #{inital_conv_block.7} parent=0 // pred_check_branch
    %60 = sbr.rel (0) target = $region25
  $region24: #{inital_conv_block.7} parent=0 // pred_region
    _
  $region25: #{inital_conv_block.7} parent=0 // pred_fallthru
    _

// kernel: inital_conv_block.6
$region0: #{inital_conv_block.6}
  #allocation0 [shape = 'u32[]', space=smem, size = 0x4, offset = 0x4, fixed_abs, tag = 'smem constant byte address 0x4 - core index']
  #allocation1 [shape = 'u32[144,128]{1,0:T(1,128)}', space=vmem, size = 0x12000, scoped, tag = 'internal scratch']
  %s0 = inlined_call_operand.vmem [shape: bf16[32,512], index: 0, kind: input, shape index: {}]
  %s1 = inlined_call_operand.vmem [shape: bf16[3,8,32], index: 1, kind: input, shape index: {}]
  %s2 = inlined_call_operand.vmem [shape: f32[2,512], index: 2, kind: input, shape index: {}]
  %s3 = inlined_call_operand.vmem [shape: f32[8,512], index: 3, kind: output, shape index: {0}]
  %s4 = inlined_call_operand.vmem [shape: f32[1,8,1], index: 4, kind: output, shape index: {1}]
  %s5 = inlined_call_operand.vmem [shape: f32[1,8,1], index: 5, kind: output, shape index: {2}]
  %6 = xla_tuple %s3, %s4, %s5
  %s7 = sld [smem:[#allocation0]]
  $region38: #{inital_conv_block.6} parent=0
    _
  %s9 = ssub.s32 1, %s7
  %s10 = scalar_select 0, %s9, %s7
  // Predicated region
  $region2: #{inital_conv_block.6} parent=0 // pred_check
    _
  $region3: #{inital_conv_block.6} parent=0 // pred_check_branch
    %12 = sbr.rel (0) target = $region5
  $region4: #{inital_conv_block.6} parent=0 // pred_region
    _
  $region5: #{inital_conv_block.6} parent=0 // pred_fallthru
    _
  // Predicated region
  $region6: #{inital_conv_block.6} parent=0 // pred_check
    _
  $region7: #{inital_conv_block.6} parent=0 // pred_check_branch
    %14 = sbr.rel (0) target = $region9
  $region8: #{inital_conv_block.6} parent=0 // pred_region
    _
  $region9: #{inital_conv_block.6} parent=0 // pred_fallthru
    _
  // Predicated region
  $region10: #{inital_conv_block.6} parent=0 // pred_check
    _
  $region11: #{inital_conv_block.6} parent=0 // pred_check_branch
    %16 = sbr.rel (0) target = $region13
  $region12: #{inital_conv_block.6} parent=0 // pred_region
    _
  $region13: #{inital_conv_block.6} parent=0 // pred_fallthru
    _
  %v18 = vld [vmem:[%s0] sm:$0xff]
  %v19 = vld [vmem:[%s0 + $0x8] sm:$0xff]
  %v20 = vld [vmem:[%s0 + $0x10] sm:$0xff]
  %v21 = vld [vmem:[%s0 + $0x18] sm:$0xff]
  %v22 = vld [vmem:[%s0 + $0x20] sm:$0xff]
  %v23 = vld [vmem:[%s0 + $0x28] sm:$0xff]
  %v24 = vld [vmem:[%s0 + $0x30] sm:$0xff]
  %v25 = vld [vmem:[%s0 + $0x38] sm:$0xff]
  %v26 = vunpack.c.l.bf16 %v18
  %v27 = vunpack.c.h.bf16 %v18
  %v28 = vunpack.c.l.bf16 %v19
  %v29 = vunpack.c.h.bf16 %v19
  %v30 = vunpack.c.l.bf16 %v20
  %v31 = vunpack.c.h.bf16 %v20
  %v32 = vunpack.c.l.bf16 %v21
  %v33 = vunpack.c.h.bf16 %v21
  %v34 = vunpack.c.l.bf16 %v22
  %v35 = vunpack.c.h.bf16 %v22
  %v36 = vunpack.c.l.bf16 %v23
  %v37 = vunpack.c.h.bf16 %v23
  %v38 = vunpack.c.l.bf16 %v24
  %v39 = vunpack.c.h.bf16 %v24
  %v40 = vunpack.c.l.bf16 %v25
  %v41 = vunpack.c.h.bf16 %v25
  %42 = vrot.lane.b32.xlu0 %v26, 1
  %v43 = vpop.permute.xlu0 %42
  %44 = vrot.lane.b32.xlu0 %v30, 1
  %v45 = vpop.permute.xlu0 %44
  %46 = vrot.lane.b32.xlu0 %v34, 1
  %v47 = vpop.permute.xlu0 %46
  %48 = vrot.lane.b32.xlu0 %v38, 1
  %v49 = vpop.permute.xlu0 %48
  %50 = vrot.lane.b32.xlu0 %v27, 1
  %v51 = vpop.permute.xlu0 %50
  %52 = vrot.lane.b32.xlu0 %v31, 1
  %v53 = vpop.permute.xlu0 %52
  %54 = vrot.lane.b32.xlu0 %v35, 1
  %v55 = vpop.permute.xlu0 %54
  %56 = vrot.lane.b32.xlu0 %v39, 1
  %v57 = vpop.permute.xlu0 %56
  %58 = vrot.lane.b32.xlu0 %v28, 1
  %v59 = vpop.permute.xlu0 %58
  %60 = vrot.lane.b32.xlu0 %v32, 1
  %v61 = vpop.permute.xlu0 %60
  %62 = vrot.lane.b32.xlu0 %v36, 1
  %v63 = vpop.permute.xlu0 %62
  %64 = vrot.lane.b32.xlu0 %v40, 1
  %v65 = vpop.permute.xlu0 %64
  %66 = vrot.lane.b32.xlu0 %v29, 1
  %v67 = vpop.permute.xlu0 %66
  %68 = vrot.lane.b32.xlu0 %v33, 1
  %v69 = vpop.permute.xlu0 %68
  %70 = vrot.lane.b32.xlu0 %v37, 1
  %v71 = vpop.permute.xlu0 %70
  %72 = vrot.lane.b32.xlu0 %v41, 1
  %v73 = vpop.permute.xlu0 %72
  %v74 = vlaneseq
  %v75 = vand.u32 %v74, 127
  %vm76 = vcmp.lt.s32.totalorder %v75, 1
  %v77 = vsel %vm76, %v59, %v67
  %v78 = vsel %vm76, %v61, %v69
  %v79 = vsel %vm76, %v63, %v71
  %v80 = vsel %vm76, %v65, %v73
  %v81 = vsel %vm76, %v51, %v59
  %v82 = vsel %vm76, %v53, %v61
  %v83 = vsel %vm76, %v55, %v63
  %v84 = vsel %vm76, %v57, %v65
  %v85 = vsel %vm76, %v43, %v51
  %v86 = vsel %vm76, %v45, %v53
  %v87 = vsel %vm76, %v47, %v55
  %v88 = vsel %vm76, %v49, %v57
  %v89 = vsel %vm76, %v67, %v43
  %v90 = vsel %vm76, %v69, %v45
  %v91 = vsel %vm76, %v71, %v47
  %v92 = vsel %vm76, %v73, %v49
  %v93 = vld [vmem:[%s2] ss:$2 sm:$0xf]
  %v95 = vlaneseq
  %v96 = vshrl.u32 %v95, 7
  %v97 = vsub.s32 0, %v96
  %v98 = vrot.slane %v93, %v97
  %v99 = vlaneseq
  %v100 = vshrl.u32 %v99, 7
  %v101 = vsub.s32 1, %v100
  %v102 = vrot.slane %v93, %v101
  %v103 = vlaneseq
  %v104 = vshrl.u32 %v103, 7
  %v105 = vsub.s32 2, %v104
  %v106 = vrot.slane %v93, %v105
  %v107 = vlaneseq
  %v108 = vshrl.u32 %v107, 7
  %v109 = vsub.s32 3, %v108
  %v110 = vrot.slane %v93, %v109
  %v115 = vmul.f32 %v89, %v98
  %v116 = vmul.f32 %v85, %v102
  %v117 = vmul.f32 %v81, %v106
  %v118 = vmul.f32 %v77, %v110
  %v119 = vmul.f32 %v90, %v98
  %v120 = vmul.f32 %v86, %v102
  %v121 = vmul.f32 %v82, %v106
  %v122 = vmul.f32 %v78, %v110
  %v123 = vmul.f32 %v91, %v98
  %v124 = vmul.f32 %v87, %v102
  %v125 = vmul.f32 %v83, %v106
  %v126 = vmul.f32 %v79, %v110
  %v127 = vmul.f32 %v92, %v98
  %v128 = vmul.f32 %v88, %v102
  %v129 = vmul.f32 %v84, %v106
  %v130 = vmul.f32 %v80, %v110
  %131 = vrot.lane.b32.xlu0 %v26, 127
  %v132 = vpop.permute.xlu0 %131
  %133 = vrot.lane.b32.xlu0 %v30, 127
  %v134 = vpop.permute.xlu0 %133
  %135 = vrot.lane.b32.xlu0 %v34, 127
  %v136 = vpop.permute.xlu0 %135
  %137 = vrot.lane.b32.xlu0 %v38, 127
  %v138 = vpop.permute.xlu0 %137
  %139 = vrot.lane.b32.xlu0 %v27, 127
  %v140 = vpop.permute.xlu0 %139
  %141 = vrot.lane.b32.xlu0 %v31, 127
  %v142 = vpop.permute.xlu0 %141
  %143 = vrot.lane.b32.xlu0 %v35, 127
  %v144 = vpop.permute.xlu0 %143
  %145 = vrot.lane.b32.xlu0 %v39, 127
  %v146 = vpop.permute.xlu0 %145
  %147 = vrot.lane.b32.xlu0 %v28, 127
  %v148 = vpop.permute.xlu0 %147
  %149 = vrot.lane.b32.xlu0 %v32, 127
  %v150 = vpop.permute.xlu0 %149
  %151 = vrot.lane.b32.xlu0 %v36, 127
  %v152 = vpop.permute.xlu0 %151
  %153 = vrot.lane.b32.xlu0 %v40, 127
  %v154 = vpop.permute.xlu0 %153
  %155 = vrot.lane.b32.xlu0 %v29, 127
  %v156 = vpop.permute.xlu0 %155
  %157 = vrot.lane.b32.xlu0 %v33, 127
  %v158 = vpop.permute.xlu0 %157
  %159 = vrot.lane.b32.xlu0 %v37, 127
  %v160 = vpop.permute.xlu0 %159
  %161 = vrot.lane.b32.xlu0 %v41, 127
  %v162 = vpop.permute.xlu0 %161
  %vm163 = vcmp.lt.s32.totalorder %v75, 127
  %v164 = vsel %vm163, %v148, %v156
  %v165 = vsel %vm163, %v150, %v158
  %v166 = vsel %vm163, %v152, %v160
  %v167 = vsel %vm163, %v154, %v162
  %v168 = vsel %vm163, %v140, %v148
  %v169 = vsel %vm163, %v142, %v150
  %v170 = vsel %vm163, %v144, %v152
  %v171 = vsel %vm163, %v146, %v154
  %v172 = vsel %vm163, %v132, %v140
  %v173 = vsel %vm163, %v134, %v142
  %v174 = vsel %vm163, %v136, %v144
  %v175 = vsel %vm163, %v138, %v146
  %v176 = vsel %vm163, %v156, %v132
  %v177 = vsel %vm163, %v158, %v134
  %v178 = vsel %vm163, %v160, %v136
  %v179 = vsel %vm163, %v162, %v138
  %s180 = scalar_lea.vmem %s2, 1
  %v181 = vld [vmem:[%s180] ss:$2 sm:$0xf]
  %v183 = vlaneseq
  %v184 = vshrl.u32 %v183, 7
  %v185 = vsub.s32 0, %v184
  %v186 = vrot.slane %v181, %v185
  %v187 = vlaneseq
  %v188 = vshrl.u32 %v187, 7
  %v189 = vsub.s32 1, %v188
  %v190 = vrot.slane %v181, %v189
  %v191 = vlaneseq
  %v192 = vshrl.u32 %v191, 7
  %v193 = vsub.s32 2, %v192
  %v194 = vrot.slane %v181, %v193
  %v195 = vlaneseq
  %v196 = vshrl.u32 %v195, 7
  %v197 = vsub.s32 3, %v196
  %v198 = vrot.slane %v181, %v197
  %v203 = vmul.f32 %v172, %v186
  %v204 = vmul.f32 %v168, %v190
  %v205 = vmul.f32 %v164, %v194
  %v206 = vmul.f32 %v176, %v198
  %v207 = vmul.f32 %v173, %v186
  %v208 = vmul.f32 %v169, %v190
  %v209 = vmul.f32 %v165, %v194
  %v210 = vmul.f32 %v177, %v198
  %v211 = vmul.f32 %v174, %v186
  %v212 = vmul.f32 %v170, %v190
  %v213 = vmul.f32 %v166, %v194
  %v214 = vmul.f32 %v178, %v198
  %v215 = vmul.f32 %v175, %v186
  %v216 = vmul.f32 %v171, %v190
  %v217 = vmul.f32 %v167, %v194
  %v218 = vmul.f32 %v179, %v198
  %s219 = scalar_lea.vmem %s1, 4
  %v220 = vld [vmem:[%s219] sm:$0xf]
  %v221 = vld [vmem:[%s1] sm:$0xf]
  %v222 = vpack.c.bf16 %v119, %v115
  %v223 = vpack.c.bf16 %v120, %v116
  %v224 = vpack.c.bf16 %v121, %v117
  %v225 = vpack.c.bf16 %v122, %v118
  %v226 = vpack.c.bf16 %v127, %v123
  %v227 = vpack.c.bf16 %v128, %v124
  %v228 = vpack.c.bf16 %v129, %v125
  %v229 = vpack.c.bf16 %v130, %v126
  %vm230 = vcmask 261120
  %v232 = vsel %vm230, %v221, 0
  %234 = vmatprep.subr.bf16.mxu0 %v223
  %235 = vmatpush1.bf16.msra.mxu0 %v222
  %236 = vmatprep.subr.bf16.mxu0 %v227
  %237 = vmatpush1.bf16.msra.mxu0 %v226
  %238 = vmatprep.subr.bf16.mxu0 0
  %239 = vmatpush1.bf16.msra.mxu0 0
  %240 = vmatprep.subr.bf16.mxu0 0
  %241 = vmatpush1.bf16.msra.mxu0 0
  %242 = vmatprep.subr.bf16.mxu0 0
  %243 = vmatpush1.bf16.msra.mxu0 0
  %244 = vmatprep.subr.bf16.mxu0 0
  %245 = vmatpush1.bf16.msra.mxu0 0
  %246 = vmatprep.subr.bf16.mxu0 0
  %247 = vmatpush1.bf16.msra.mxu0 0
  %248 = vmatprep.subr.bf16.mxu0 0
  %249 = vmatpush1.bf16.msra.mxu0 0
  %250 = vmatprep.subr.bf16.mxu0 0
  %251 = vmatpush1.bf16.msra.mxu0 0
  %252 = vmatprep.subr.bf16.mxu0 0
  %253 = vmatpush1.bf16.msra.mxu0 0
  %254 = vmatprep.subr.bf16.mxu0 0
  %255 = vmatpush1.bf16.msra.mxu0 0
  %256 = vmatprep.subr.bf16.mxu0 0
  %257 = vmatpush1.bf16.msra.mxu0 0
  %258 = vmatprep.subr.bf16.mxu0 0
  %259 = vmatpush1.bf16.msra.mxu0 0
  %260 = vmatprep.subr.bf16.mxu0 0
  %261 = vmatpush1.bf16.msra.mxu0 0
  %262 = vmatprep.subr.bf16.mxu0 0
  %263 = vmatpush1.bf16.msra.mxu0 0
  %264 = vmatprep.subr.bf16.mxu0 0
  %265 = vmatpush1.bf16.msra.mxu0 0
  %266 = vmatprep.mubr.bf16.mxu0 0
  %267 = vmatmul.mubr.bf16.gmra.mrb[0].mxu0 %v232
  %v268 = vpop.f32.mrb[0].mxu0
  %v269 = vadd.f32 0.0, %v268
  %v270 = vpop.f32.mrb[0].mxu0
  %v271 = vadd.f32 0.0, %v270
  %v272 = vpop.f32.mrb[0].mxu0
  %v273 = vpop.f32.mrb[0].mxu0
  %274 = vdwg.mxu0
  %275 = vmatprep.subr.bf16.mxu0 %v225
  %276 = vmatpush1.bf16.msra.mxu0 %v224
  %277 = vmatprep.subr.bf16.mxu0 %v229
  %278 = vmatpush1.bf16.msra.mxu0 %v228
  %279 = vmatprep.subr.bf16.mxu0 0
  %280 = vmatpush1.bf16.msra.mxu0 0
  %281 = vmatprep.subr.bf16.mxu0 0
  %282 = vmatpush1.bf16.msra.mxu0 0
  %283 = vmatprep.subr.bf16.mxu0 0
  %284 = vmatpush1.bf16.msra.mxu0 0
  %285 = vmatprep.subr.bf16.mxu0 0
  %286 = vmatpush1.bf16.msra.mxu0 0
  %287 = vmatprep.subr.bf16.mxu0 0
  %288 = vmatpush1.bf16.msra.mxu0 0
  %289 = vmatprep.subr.bf16.mxu0 0
  %290 = vmatpush1.bf16.msra.mxu0 0
  %291 = vmatprep.subr.bf16.mxu0 0
  %292 = vmatpush1.bf16.msra.mxu0 0
  %293 = vmatprep.subr.bf16.mxu0 0
  %294 = vmatpush1.bf16.msra.mxu0 0
  %295 = vmatprep.subr.bf16.mxu0 0
  %296 = vmatpush1.bf16.msra.mxu0 0
  %297 = vmatprep.subr.bf16.mxu0 0
  %298 = vmatpush1.bf16.msra.mxu0 0
  %299 = vmatprep.subr.bf16.mxu0 0
  %300 = vmatpush1.bf16.msra.mxu0 0
  %301 = vmatprep.subr.bf16.mxu0 0
  %302 = vmatpush1.bf16.msra.mxu0 0
  %303 = vmatprep.subr.bf16.mxu0 0
  %304 = vmatpush1.bf16.msra.mxu0 0
  %305 = vmatprep.subr.bf16.mxu0 0
  %306 = vmatpush1.bf16.msra.mxu0 0
  %307 = vmatprep.mubr.bf16.mxu0 0
  %308 = vmatmul.mubr.bf16.gmra.mrb[0].mxu0 %v232
  %v309 = vpop.f32.mrb[0].mxu0
  %v310 = vadd.f32 0.0, %v309
  %v311 = vpop.f32.mrb[0].mxu0
  %v312 = vadd.f32 0.0, %v311
  %v313 = vpop.f32.mrb[0].mxu0
  %v314 = vpop.f32.mrb[0].mxu0
  %315 = vdwg.mxu0
  %v324 = vunpack.c.l.b16 %v18
  %v325 = vunpack.c.h.b16 %v18
  %v326 = vunpack.c.l.b16 %v19
  %v327 = vunpack.c.h.b16 %v19
  %v328 = vunpack.c.l.b16 %v20
  %v329 = vunpack.c.h.b16 %v20
  %v330 = vunpack.c.l.b16 %v21
  %v331 = vunpack.c.h.b16 %v21
  %v332 = vunpack.c.l.b16 %v22
  %v333 = vunpack.c.h.b16 %v22
  %v334 = vunpack.c.l.b16 %v23
  %v335 = vunpack.c.h.b16 %v23
  %v336 = vunpack.c.l.b16 %v24
  %v337 = vunpack.c.h.b16 %v24
  %v338 = vunpack.c.l.b16 %v25
  %v339 = vunpack.c.h.b16 %v25
  %v340 = vpack.c.b16 %v328, %v324
  %v341 = vpack.c.b16 %v329, %v325
  %v342 = vpack.c.b16 %v330, %v326
  %v343 = vpack.c.b16 %v331, %v327
  %v344 = vpack.c.b16 %v336, %v332
  %v345 = vpack.c.b16 %v337, %v333
  %v346 = vpack.c.b16 %v338, %v334
  %v347 = vpack.c.b16 %v339, %v335
  %v357 = vsel %vm230, %v220, 0
  %359 = vmatprep.subr.bf16.mxu0 %v341
  %360 = vmatpush1.bf16.msra.mxu0 %v340
  %361 = vmatprep.subr.bf16.mxu0 %v345
  %362 = vmatpush1.bf16.msra.mxu0 %v344
  %363 = vmatprep.subr.bf16.mxu0 0
  %364 = vmatpush1.bf16.msra.mxu0 0
  %365 = vmatprep.subr.bf16.mxu0 0
  %366 = vmatpush1.bf16.msra.mxu0 0
  %367 = vmatprep.subr.bf16.mxu0 0
  %368 = vmatpush1.bf16.msra.mxu0 0
  %369 = vmatprep.subr.bf16.mxu0 0
  %370 = vmatpush1.bf16.msra.mxu0 0
  %371 = vmatprep.subr.bf16.mxu0 0
  %372 = vmatpush1.bf16.msra.mxu0 0
  %373 = vmatprep.subr.bf16.mxu0 0
  %374 = vmatpush1.bf16.msra.mxu0 0
  %375 = vmatprep.subr.bf16.mxu0 0
  %376 = vmatpush1.bf16.msra.mxu0 0
  %377 = vmatprep.subr.bf16.mxu0 0
  %378 = vmatpush1.bf16.msra.mxu0 0
  %379 = vmatprep.subr.bf16.mxu0 0
  %380 = vmatpush1.bf16.msra.mxu0 0
  %381 = vmatprep.subr.bf16.mxu0 0
  %382 = vmatpush1.bf16.msra.mxu0 0
  %383 = vmatprep.subr.bf16.mxu0 0
  %384 = vmatpush1.bf16.msra.mxu0 0
  %385 = vmatprep.subr.bf16.mxu0 0
  %386 = vmatpush1.bf16.msra.mxu0 0
  %387 = vmatprep.subr.bf16.mxu0 0
  %388 = vmatpush1.bf16.msra.mxu0 0
  %389 = vmatprep.subr.bf16.mxu0 0
  %390 = vmatpush1.bf16.msra.mxu0 0
  %391 = vmatprep.mubr.bf16.mxu0 0
  %392 = vmatmul.mubr.bf16.gmra.mrb[0].mxu0 %v357
  %v393 = vpop.f32.mrb[0].mxu0
  %v394 = vadd.f32 %v269, %v393
  %v395 = vpop.f32.mrb[0].mxu0
  %v396 = vadd.f32 %v271, %v395
  %v397 = vpop.f32.mrb[0].mxu0
  %v398 = vpop.f32.mrb[0].mxu0
  %399 = vdwg.mxu0
  %400 = vmatprep.subr.bf16.mxu0 %v343
  %401 = vmatpush1.bf16.msra.mxu0 %v342
  %402 = vmatprep.subr.bf16.mxu0 %v347
  %403 = vmatpush1.bf16.msra.mxu0 %v346
  %404 = vmatprep.subr.bf16.mxu0 0
  %405 = vmatpush1.bf16.msra.mxu0 0
  %406 = vmatprep.subr.bf16.mxu0 0
  %407 = vmatpush1.bf16.msra.mxu0 0
  %408 = vmatprep.subr.bf16.mxu0 0
  %409 = vmatpush1.bf16.msra.mxu0 0
  %410 = vmatprep.subr.bf16.mxu0 0
  %411 = vmatpush1.bf16.msra.mxu0 0
  %412 = vmatprep.subr.bf16.mxu0 0
  %413 = vmatpush1.bf16.msra.mxu0 0
  %414 = vmatprep.subr.bf16.mxu0 0
  %415 = vmatpush1.bf16.msra.mxu0 0
  %416 = vmatprep.subr.bf16.mxu0 0
  %417 = vmatpush1.bf16.msra.mxu0 0
  %418 = vmatprep.subr.bf16.mxu0 0
  %419 = vmatpush1.bf16.msra.mxu0 0
  %420 = vmatprep.subr.bf16.mxu0 0
  %421 = vmatpush1.bf16.msra.mxu0 0
  %422 = vmatprep.subr.bf16.mxu0 0
  %423 = vmatpush1.bf16.msra.mxu0 0
  %424 = vmatprep.subr.bf16.mxu0 0
  %425 = vmatpush1.bf16.msra.mxu0 0
  %426 = vmatprep.subr.bf16.mxu0 0
  %427 = vmatpush1.bf16.msra.mxu0 0
  %428 = vmatprep.subr.bf16.mxu0 0
  %429 = vmatpush1.bf16.msra.mxu0 0
  %430 = vmatprep.subr.bf16.mxu0 0
  %431 = vmatpush1.bf16.msra.mxu0 0
  %432 = vmatprep.mubr.bf16.mxu0 0
  %433 = vmatmul.mubr.bf16.gmra.mrb[0].mxu0 %v357
  %v434 = vpop.f32.mrb[0].mxu0
  %v435 = vadd.f32 %v310, %v434
  %v436 = vpop.f32.mrb[0].mxu0
  %v437 = vadd.f32 %v312, %v436
  %v438 = vpop.f32.mrb[0].mxu0
  %v439 = vpop.f32.mrb[0].mxu0
  %440 = vdwg.mxu0
  %s441 = scalar_lea.vmem %s1, 8
  %v442 = vld [vmem:[%s441] sm:$0xf]
  %v443 = vpack.c.bf16 %v207, %v203
  %v444 = vpack.c.bf16 %v208, %v204
  %v445 = vpack.c.bf16 %v209, %v205
  %v446 = vpack.c.bf16 %v210, %v206
  %v447 = vpack.c.bf16 %v215, %v211
  %v448 = vpack.c.bf16 %v216, %v212
  %v449 = vpack.c.bf16 %v217, %v213
  %v450 = vpack.c.bf16 %v218, %v214
  %v452 = vsel %vm230, %v442, 0
  %454 = vmatprep.subr.bf16.mxu0 %v444
  %455 = vmatpush1.bf16.msra.mxu0 %v443
  %456 = vmatprep.subr.bf16.mxu0 %v448
  %457 = vmatpush1.bf16.msra.mxu0 %v447
  %458 = vmatprep.subr.bf16.mxu0 0
  %459 = vmatpush1.bf16.msra.mxu0 0
  %460 = vmatprep.subr.bf16.mxu0 0
  %461 = vmatpush1.bf16.msra.mxu0 0
  %462 = vmatprep.subr.bf16.mxu0 0
  %463 = vmatpush1.bf16.msra.mxu0 0
  %464 = vmatprep.subr.bf16.mxu0 0
  %465 = vmatpush1.bf16.msra.mxu0 0
  %466 = vmatprep.subr.bf16.mxu0 0
  %467 = vmatpush1.bf16.msra.mxu0 0
  %468 = vmatprep.subr.bf16.mxu0 0
  %469 = vmatpush1.bf16.msra.mxu0 0
  %470 = vmatprep.subr.bf16.mxu0 0
  %471 = vmatpush1.bf16.msra.mxu0 0
  %472 = vmatprep.subr.bf16.mxu0 0
  %473 = vmatpush1.bf16.msra.mxu0 0
  %474 = vmatprep.subr.bf16.mxu0 0
  %475 = vmatpush1.bf16.msra.mxu0 0
  %476 = vmatprep.subr.bf16.mxu0 0
  %477 = vmatpush1.bf16.msra.mxu0 0
  %478 = vmatprep.subr.bf16.mxu0 0
  %479 = vmatpush1.bf16.msra.mxu0 0
  %480 = vmatprep.subr.bf16.mxu0 0
  %481 = vmatpush1.bf16.msra.mxu0 0
  %482 = vmatprep.subr.bf16.mxu0 0
  %483 = vmatpush1.bf16.msra.mxu0 0
  %484 = vmatprep.subr.bf16.mxu0 0
  %485 = vmatpush1.bf16.msra.mxu0 0
  %486 = vmatprep.mubr.bf16.mxu0 0
  %487 = vmatmul.mubr.bf16.gmra.mrb[0].mxu0 %v452
  %v488 = vpop.f32.mrb[0].mxu0
  %v489 = vadd.f32 0.0, %v488
  %v490 = vpop.f32.mrb[0].mxu0
  %v491 = vadd.f32 0.0, %v490
  %v492 = vpop.f32.mrb[0].mxu0
  %v493 = vpop.f32.mrb[0].mxu0
  %494 = vdwg.mxu0
  %495 = vmatprep.subr.bf16.mxu0 %v446
  %496 = vmatpush1.bf16.msra.mxu0 %v445
  %497 = vmatprep.subr.bf16.mxu0 %v450
  %498 = vmatpush1.bf16.msra.mxu0 %v449
  %499 = vmatprep.subr.bf16.mxu0 0
  %500 = vmatpush1.bf16.msra.mxu0 0
  %501 = vmatprep.subr.bf16.mxu0 0
  %502 = vmatpush1.bf16.msra.mxu0 0
  %503 = vmatprep.subr.bf16.mxu0 0
  %504 = vmatpush1.bf16.msra.mxu0 0
  %505 = vmatprep.subr.bf16.mxu0 0
  %506 = vmatpush1.bf16.msra.mxu0 0
  %507 = vmatprep.subr.bf16.mxu0 0
  %508 = vmatpush1.bf16.msra.mxu0 0
  %509 = vmatprep.subr.bf16.mxu0 0
  %510 = vmatpush1.bf16.msra.mxu0 0
  %511 = vmatprep.subr.bf16.mxu0 0
  %512 = vmatpush1.bf16.msra.mxu0 0
  %513 = vmatprep.subr.bf16.mxu0 0
  %514 = vmatpush1.bf16.msra.mxu0 0
  %515 = vmatprep.subr.bf16.mxu0 0
  %516 = vmatpush1.bf16.msra.mxu0 0
  %517 = vmatprep.subr.bf16.mxu0 0
  %518 = vmatpush1.bf16.msra.mxu0 0
  %519 = vmatprep.subr.bf16.mxu0 0
  %520 = vmatpush1.bf16.msra.mxu0 0
  %521 = vmatprep.subr.bf16.mxu0 0
  %522 = vmatpush1.bf16.msra.mxu0 0
  %523 = vmatprep.subr.bf16.mxu0 0
  %524 = vmatpush1.bf16.msra.mxu0 0
  %525 = vmatprep.subr.bf16.mxu0 0
  %526 = vmatpush1.bf16.msra.mxu0 0
  %527 = vmatprep.mubr.bf16.mxu0 0
  %528 = vmatmul.mubr.bf16.gmra.mrb[0].mxu0 %v452
  %v529 = vpop.f32.mrb[0].mxu0
  %v530 = vadd.f32 0.0, %v529
  %v531 = vpop.f32.mrb[0].mxu0
  %v532 = vadd.f32 0.0, %v531
  %v533 = vpop.f32.mrb[0].mxu0
  %v534 = vpop.f32.mrb[0].mxu0
  %535 = vdwg.mxu0
  %v536 = vadd.f32 %v394, %v489
  %v537 = vadd.f32 %v396, %v491
  %v538 = vadd.f32 %v435, %v530
  %v539 = vadd.f32 %v437, %v532
  %540 = vst [vmem:[%s3] sm:$0xff] %v536
  %541 = vst [vmem:[%s3 + $0x8] sm:$0xff] %v537
  %542 = vst [vmem:[%s3 + $0x10] sm:$0xff] %v538
  %543 = vst [vmem:[%s3 + $0x18] sm:$0xff] %v539
  %v544 = vadd.f32 %v536, %v537
  %v545 = vadd.f32 %v544, %v538
  %v546 = vadd.f32 %v545, %v539
  %547 = vadd.xlane.f32.xlu0 %v546
  %v548 = vpop.xlane.xlu0 %547
  %vm549 = vcmask 7168
  %550 = vst.msk [vmem:[%s4] sm:$0xff] %vm549, %v548
  %v551 = vmul.f32 %v536, %v536
  %v552 = vmul.f32 %v537, %v537
  %v553 = vmul.f32 %v538, %v538
  %v554 = vmul.f32 %v539, %v539
  %v555 = vadd.f32 %v551, %v552
  %v556 = vadd.f32 %v555, %v553
  %v557 = vadd.f32 %v556, %v554
  %558 = vadd.xlane.f32.xlu0 %v557
  %v559 = vpop.xlane.xlu0 %558
  %560 = vst.msk [vmem:[%s5] sm:$0xff] %vm549, %v559
  // Predicated region
  $region14: #{inital_conv_block.6} parent=0 // pred_check
    _
  $region15: #{inital_conv_block.6} parent=0 // pred_check_branch
    %562 = sbr.rel (0) target = $region17
  $region16: #{inital_conv_block.6} parent=0 // pred_region
    _
  $region17: #{inital_conv_block.6} parent=0 // pred_fallthru
    _
  // Predicated region
  $region18: #{inital_conv_block.6} parent=0 // pred_check
    _
  $region19: #{inital_conv_block.6} parent=0 // pred_check_branch
    %564 = sbr.rel (0) target = $region21
  $region20: #{inital_conv_block.6} parent=0 // pred_region
    _
  $region21: #{inital_conv_block.6} parent=0 // pred_fallthru
    _
  // Predicated region
  $region22: #{inital_conv_block.6} parent=0 // pred_check
    _
  $region23: #{inital_conv_block.6} parent=0 // pred_check_branch
    %566 = sbr.rel (0) target = $region25
  $region24: #{inital_conv_block.6} parent=0 // pred_region
    _
  $region25: #{inital_conv_block.6} parent=0 // pred_fallthru
    _
  // Predicated region
  $region26: #{inital_conv_block.6} parent=0 // pred_check
    _
  $region27: #{inital_conv_block.6} parent=0 // pred_check_branch
    %568 = sbr.rel (0) target = $region29
  $region28: #{inital_conv_block.6} parent=0 // pred_region
    _
  $region29: #{inital_conv_block.6} parent=0 // pred_fallthru
    _
  // Predicated region
  $region30: #{inital_conv_block.6} parent=0 // pred_check
    _
  $region31: #{inital_conv_block.6} parent=0 // pred_check_branch
    %570 = sbr.rel (0) target = $region33
  $region32: #{inital_conv_block.6} parent=0 // pred_region
    _
  $region33: #{inital_conv_block.6} parent=0 // pred_fallthru
    _
  // Predicated region
  $region34: #{inital_conv_block.6} parent=0 // pred_check
    _
  $region35: #{inital_conv_block.6} parent=0 // pred_check_branch
    %572 = sbr.rel (0) target = $region37
  $region36: #{inital_conv_block.6} parent=0 // pred_region
    _
  $region37: #{inital_conv_block.6} parent=0 // pred_fallthru
    _

</llo_original>
